<compile_context>
chip_gen: v7x
topology: tpu7x:2x2x1
jax: 0.10.0
libtpu: 0.0.40
codegen_flags: <defaults>
</compile_context>

<pallas_src>
import jax
import jax.numpy as jnp
from jax import lax
from jax.experimental import pallas as pl
from jax.experimental.pallas import tpu as pltpu


def mhfa_kernel(k_ref, v_ref,
                wka_ref, bka_ref,
                wv_ref, bv_ref,
                wp_ref, bp_ref,
                out_ref):
    Bt, T, D = k_ref.shape
    C = wv_ref.shape[1]
    H = wka_ref.shape[1]

    # Flatten (Bt, T) so each projection is one large MXU matmul (M = Bt*T).
    k2 = k_ref[...].reshape(Bt * T, D)
    v2 = v_ref[...].reshape(Bt * T, D)

    # k-path: folded (compression + attention-head) linear -> attention logits.
    att = jnp.dot(k2, wka_ref[...], preferred_element_type=jnp.float32) + bka_ref[...]
    # v-path: compression linear.
    vc = jnp.dot(v2, wv_ref[...], preferred_element_type=jnp.float32) + bv_ref[...]

    # Softmax over the time axis (dim=1 of the (B, T, H) tensor in PyTorch),
    # all in float32.
    att3 = att.reshape(Bt, T, H)
    att3 = att3 - jnp.max(att3, axis=1, keepdims=True)
    p = jnp.exp(att3)
    p = p * pl.reciprocal(jnp.sum(p, axis=1, keepdims=True), approx=False)

    # pooled[b, h, c] = sum_t p[b, t, h] * vc[b, t, c]   -> (Bt, H, C)
    vc3 = vc.reshape(Bt, T, C)
    pooled = lax.dot_general(p, vc3, (((1,), (1,)), ((0,), (0,))),
                             preferred_element_type=jnp.float32)

    # Row-major (H, C) flatten matches torch .reshape(b, -1); projection is a
    # real (M=Bt, K=H*C, N=O_pad) MXU matmul with a lane-dense output store.
    flat = pooled.reshape(Bt, H * C)
    out = jnp.dot(flat, wp_ref[...], preferred_element_type=jnp.float32) + bp_ref[...]
    out_ref[...] = out.astype(out_ref.dtype)


def _choose_block_b(B, T, D, C, H, O_pad, bytes_per=4, vmem_budget=40 * 1024 * 1024):
    """Largest batch block that fits a conservative VMEM budget (v7x-safe),
    is sublane-friendly for the output block, divides B, and (if possible)
    leaves >= 2 grid steps so the parallel axis can use both v7x cores."""
    # Constant-index_map weight blocks (counted double-buffered, conservative).
    weight_bytes = 2 * bytes_per * (D * C + C + D * H + H + H * C * O_pad + O_pad)
    avail = max(vmem_budget - weight_bytes, 1 << 20)
    # Per batch row: double-buffered k/v input tiles + output tile + f32
    # intermediates (vc, att/p, pooled, flat) + reshape-copy headroom.
    per_row = bytes_per * (2 * 2 * T * D + 2 * O_pad
                           + T * C + 2 * T * H + 2 * H * C + 2 * T * D)
    cap = max(1, int(avail // per_row))

    cands = [b for b in range(min(cap, B), 0, -1)
             if B % b == 0 and (b % 8 == 0 or b == B)]
    if not cands:
        cands = [B]
    for b in cands:
        if B // b >= 2:
            return b
    return cands[0]


def mhfa_forward(k, v, params, *, block_b=None, vmem_limit_bytes=48 * 1024 * 1024):
    """k, v: (B, T, D_in) float32.  params: dict of (in,out) weights + (1,out) biases."""
    B, T, D = k.shape
    C = params["wv"].shape[1]
    H = params["wa"].shape[1]
    O = params["wp"].shape[1]

    # Fold the k-path linears: cmp_linear_k followed by att_head is a single
    # (D_in, H) linear.  Tiny one-time matmuls; constant-folded under jit.
    wka = params["wk"] @ params["wa"]                    # (D, H)
    bka = params["bk"] @ params["wa"] + params["ba"]     # (1, H)

    # Lane-dense output: pad the projection columns to a multiple of 128 so the
    # per-step output store is an unmasked vst; slice back afterwards.
    O_pad = pl.cdiv(O, 128) * 128
    wp = params["wp"]
    bp = params["bp"]
    if O_pad != O:
        wp = jnp.pad(wp, ((0, 0), (0, O_pad - O)))
        bp = jnp.pad(bp, ((0, 0), (0, O_pad - O)))

    if block_b is None:
        block_b = _choose_block_b(B, T, D, C, H, O_pad)
    assert B % block_b == 0, (B, block_b)
    assert block_b % 8 == 0 or block_b == B, block_b
    grid = (B // block_b,)

    full = lambda shape: pl.BlockSpec(shape, lambda b: tuple(0 for _ in shape))

    out_pad = pl.pallas_call(
        mhfa_kernel,
        out_shape=jax.ShapeDtypeStruct((B, O_pad), jnp.float32),
        grid_spec=pltpu.PrefetchScalarGridSpec(
            num_scalar_prefetch=0,
            grid=grid,
            in_specs=[
                pl.BlockSpec((block_b, T, D), lambda b: (b, 0, 0)),   # k
                pl.BlockSpec((block_b, T, D), lambda b: (b, 0, 0)),   # v
                full((D, H)), full((1, H)),                           # Wka, bka (folded)
                full((D, C)), full((1, C)),                           # Wv, bv
                full((H * C, O_pad)), full((1, O_pad)),               # Wp, bp
            ],
            out_specs=pl.BlockSpec((block_b, O_pad), lambda b: (b, 0)),
        ),
        compiler_params=pltpu.CompilerParams(
            dimension_semantics=("parallel",),
            vmem_limit_bytes=vmem_limit_bytes),
    )(k, v,
      wka, bka,
      params["wv"], params["bv"],
      wp, bp)

    return out_pad[:, :O]


def mhfa_reference(k, v, params):
    """Pure-JAX reference mirroring the PyTorch forward (unfused k-path)."""
    kc = k @ params["wk"] + params["bk"]                      # (B, T, C)
    vc = v @ params["wv"] + params["bv"]                      # (B, T, C)
    att = kc @ params["wa"] + params["ba"]                    # (B, T, H)
    p = jax.nn.softmax(att, axis=1)                           # softmax over T
    pooled = jnp.einsum("bth,btc->bhc", p, vc)                # (B, H, C)
    flat = pooled.reshape(pooled.shape[0], -1)                # (B, H*C)
    return flat @ params["wp"] + params["bp"]                 # (B, O)


def init_params(key, inputs_dim, compression_dim, head_nb, outputs_dim):
    """Deterministic synthetic params; stored as (in, out) / (1, out)."""
    ks = jax.random.split(key, 8)
    s = 0.05
    return {
        "wk": s * jax.random.normal(ks[0], (inputs_dim, compression_dim), jnp.float32),
        "bk": s * jax.random.normal(ks[1], (1, compression_dim), jnp.float32),
        "wv": s * jax.random.normal(ks[2], (inputs_dim, compression_dim), jnp.float32),
        "bv": s * jax.random.normal(ks[3], (1, compression_dim), jnp.float32),
        "wa": s * jax.random.normal(ks[4], (compression_dim, head_nb), jnp.float32),
        "ba": s * jax.random.normal(ks[5], (1, head_nb), jnp.float32),
        "wp": s * jax.random.normal(ks[6], (head_nb * compression_dim, outputs_dim), jnp.float32),
        "bp": s * jax.random.normal(ks[7], (1, outputs_dim), jnp.float32),
    }


if __name__ == "__main__":
    # Small shapes consistent with the module's forward.
    B, T = 16, 16         # batch, sequence length (B chosen so Bt=8 -> 2 grid steps)
    D_IN = 64             # inputs_dim
    C = 32                # compression_dim
    H = 8                 # head_nb
    O = 32                # outputs_dim

    key = jax.random.PRNGKey(0)
    kp, kk, kv = jax.random.split(key, 3)

    params = init_params(kp, D_IN, C, H, O)
    k = jax.random.normal(kk, (B, T, D_IN), jnp.float32)
    v = jax.random.normal(kv, (B, T, D_IN), jnp.float32)

    out = mhfa_forward(k, v, params)
    out = jax.block_until_ready(out)

    ref = mhfa_reference(k, v, params)
    assert out.shape == (B, O), out.shape
    max_err = float(jnp.max(jnp.abs(out - ref)))
    assert jnp.allclose(out, ref, atol=2e-4, rtol=2e-4), max_err

    print("KERNEL_OK")
</pallas_src>

<mosaic_0001>
module attributes {stable_mosaic.version = 11 : i64} {
  func.func @mhfa_kernel(%arg0: i32, %arg1: memref<8x16x64xf32, #tpu.memory_space<vmem>>, %arg2: memref<8x16x64xf32, #tpu.memory_space<vmem>>, %arg3: memref<64x8xf32, #tpu.memory_space<vmem>>, %arg4: memref<1x8xf32, #tpu.memory_space<vmem>>, %arg5: memref<64x32xf32, #tpu.memory_space<vmem>>, %arg6: memref<1x32xf32, #tpu.memory_space<vmem>>, %arg7: memref<256x128xf32, #tpu.memory_space<vmem>>, %arg8: memref<1x128xf32, #tpu.memory_space<vmem>>, %arg9: memref<8x128xf32, #tpu.memory_space<vmem>>) attributes {dimension_semantics = [#tpu.dimension_semantics<parallel>], iteration_bounds = array<i64: 2>, scalar_prefetch = 0 : i64, scratch_operands = 0 : i64, tpu.core_type = #tpu.core_type<tc>, window_params = [{transform_indices = @transform_0, window_bounds = array<i64: 8, 16, 64>}, {transform_indices = @transform_1, window_bounds = array<i64: 8, 16, 64>}, {pipeline_mode = #tpu.pipeline_mode<synchronous>, transform_indices = @transform_2, window_bounds = array<i64: 64, 8>}, {pipeline_mode = #tpu.pipeline_mode<synchronous>, transform_indices = @transform_3, window_bounds = array<i64: 1, 8>}, {pipeline_mode = #tpu.pipeline_mode<synchronous>, transform_indices = @transform_4, window_bounds = array<i64: 64, 32>}, {pipeline_mode = #tpu.pipeline_mode<synchronous>, transform_indices = @transform_5, window_bounds = array<i64: 1, 32>}, {pipeline_mode = #tpu.pipeline_mode<synchronous>, transform_indices = @transform_6, window_bounds = array<i64: 256, 128>}, {pipeline_mode = #tpu.pipeline_mode<synchronous>, transform_indices = @transform_7, window_bounds = array<i64: 1, 128>}, {transform_indices = @transform_8, window_bounds = array<i64: 8, 128>}]} {
    %c0 = arith.constant 0 : index
    %c0_0 = arith.constant 0 : index
    %c0_1 = arith.constant 0 : index
    %0 = vector.load %arg1[%c0, %c0_0, %c0_1] : memref<8x16x64xf32, #tpu.memory_space<vmem>>, vector<8x16x64xf32>
    %1 = vector.shape_cast %0 : vector<8x16x64xf32> to vector<128x64xf32>
    %c0_2 = arith.constant 0 : index
    %c0_3 = arith.constant 0 : index
    %c0_4 = arith.constant 0 : index
    %2 = vector.load %arg2[%c0_2, %c0_3, %c0_4] : memref<8x16x64xf32, #tpu.memory_space<vmem>>, vector<8x16x64xf32>
    %3 = vector.shape_cast %2 : vector<8x16x64xf32> to vector<128x64xf32>
    %c0_5 = arith.constant 0 : index
    %c0_6 = arith.constant 0 : index
    %4 = vector.load %arg3[%c0_5, %c0_6] : memref<64x8xf32, #tpu.memory_space<vmem>>, vector<64x8xf32>
    %cst = arith.constant dense<0.000000e+00> : vector<128x8xf32>
    %5 = tpu.matmul %1, %4, %cst {dimension_numbers = #tpu.dot_dimension_numbers<[1], [0], [0], [1], [0, 0, 1, 1], [], []>} : vector<128x64xf32>, vector<64x8xf32>, vector<128x8xf32> -> vector<128x8xf32>
    %c0_7 = arith.constant 0 : index
    %c0_8 = arith.constant 0 : index
    %6 = vector.load %arg4[%c0_7, %c0_8] : memref<1x8xf32, #tpu.memory_space<vmem>>, vector<1x8xf32>
    %7 = vector.broadcast %6 : vector<1x8xf32> to vector<128x8xf32>
    %8 = arith.addf %5, %7 : vector<128x8xf32>
    %c0_9 = arith.constant 0 : index
    %c0_10 = arith.constant 0 : index
    %9 = vector.load %arg5[%c0_9, %c0_10] : memref<64x32xf32, #tpu.memory_space<vmem>>, vector<64x32xf32>
    %cst_11 = arith.constant dense<0.000000e+00> : vector<128x32xf32>
    %10 = tpu.matmul %3, %9, %cst_11 {dimension_numbers = #tpu.dot_dimension_numbers<[1], [0], [0], [1], [0, 0, 1, 1], [], []>} : vector<128x64xf32>, vector<64x32xf32>, vector<128x32xf32> -> vector<128x32xf32>
    %c0_12 = arith.constant 0 : index
    %c0_13 = arith.constant 0 : index
    %11 = vector.load %arg6[%c0_12, %c0_13] : memref<1x32xf32, #tpu.memory_space<vmem>>, vector<1x32xf32>
    %12 = vector.broadcast %11 : vector<1x32xf32> to vector<128x32xf32>
    %13 = arith.addf %10, %12 : vector<128x32xf32>
    %14 = vector.shape_cast %8 : vector<128x8xf32> to vector<8x16x8xf32>
    %cst_14 = arith.constant dense<0xFF800000> : vector<8x8xf32>
    %15 = vector.multi_reduction <maximumf>, %14, %cst_14 [1] : vector<8x16x8xf32> to vector<8x8xf32>
    %16 = vector.shape_cast %15 : vector<8x8xf32> to vector<8x1x8xf32>
    %17 = vector.broadcast %16 : vector<8x1x8xf32> to vector<8x16x8xf32>
    %18 = arith.subf %14, %17 : vector<8x16x8xf32>
    %19 = math.exp %18 : vector<8x16x8xf32>
    %cst_15 = arith.constant dense<0.000000e+00> : vector<8x8xf32>
    %20 = vector.multi_reduction <add>, %19, %cst_15 [1] : vector<8x16x8xf32> to vector<8x8xf32>
    %21 = vector.shape_cast %20 : vector<8x8xf32> to vector<8x1x8xf32>
    %22 = tpu.reciprocal %21 : vector<8x1x8xf32> -> vector<8x1x8xf32>
    %23 = vector.broadcast %22 : vector<8x1x8xf32> to vector<8x16x8xf32>
    %24 = arith.mulf %19, %23 : vector<8x16x8xf32>
    %25 = vector.shape_cast %13 : vector<128x32xf32> to vector<8x16x32xf32>
    %cst_16 = arith.constant dense<0.000000e+00> : vector<8x8x32xf32>
    %26 = tpu.matmul %24, %25, %cst_16 {dimension_numbers = #tpu.dot_dimension_numbers<[1], [1], [2], [2], [0, 0, 0, 2, 1, 2], [0], [0]>} : vector<8x16x8xf32>, vector<8x16x32xf32>, vector<8x8x32xf32> -> vector<8x8x32xf32>
    %27 = vector.shape_cast %26 : vector<8x8x32xf32> to vector<8x256xf32>
    %c0_17 = arith.constant 0 : index
    %c0_18 = arith.constant 0 : index
    %28 = vector.load %arg7[%c0_17, %c0_18] : memref<256x128xf32, #tpu.memory_space<vmem>>, vector<256x128xf32>
    %cst_19 = arith.constant dense<0.000000e+00> : vector<8x128xf32>
    %29 = tpu.matmul %27, %28, %cst_19 {dimension_numbers = #tpu.dot_dimension_numbers<[1], [0], [0], [1], [0, 0, 1, 1], [], []>} : vector<8x256xf32>, vector<256x128xf32>, vector<8x128xf32> -> vector<8x128xf32>
    %c0_20 = arith.constant 0 : index
    %c0_21 = arith.constant 0 : index
    %30 = vector.load %arg8[%c0_20, %c0_21] : memref<1x128xf32, #tpu.memory_space<vmem>>, vector<1x128xf32>
    %31 = vector.broadcast %30 : vector<1x128xf32> to vector<8x128xf32>
    %32 = arith.addf %29, %31 : vector<8x128xf32>
    %c0_22 = arith.constant 0 : index
    %c0_23 = arith.constant 0 : index
    %33 = vector.load %arg9[%c0_22, %c0_23] : memref<8x128xf32, #tpu.memory_space<vmem>>, vector<8x128xf32>
    tpu.vector_store %arg9[%c0_22, %c0_23], %32 {strides = array<i32>} : memref<8x128xf32, #tpu.memory_space<vmem>>, vector<8x128xf32>,
    return
  }
  func.func @transform_0(%arg0: i32) -> (i32, i32, i32) {
    %c0_i32 = arith.constant 0 : i32
    %c0_i32_0 = arith.constant 0 : i32
    %c0_i32_1 = arith.constant 0 : i32
    return %arg0, %c0_i32, %c0_i32_0 : i32, i32, i32
  }
  func.func @transform_1(%arg0: i32) -> (i32, i32, i32) {
    %c0_i32 = arith.constant 0 : i32
    %c0_i32_0 = arith.constant 0 : i32
    %c0_i32_1 = arith.constant 0 : i32
    return %arg0, %c0_i32, %c0_i32_0 : i32, i32, i32
  }
  func.func @transform_2(%arg0: i32) -> (i32, i32) {
    %c0_i32 = arith.constant 0 : i32
    %c0_i32_0 = arith.constant 0 : i32
    %c0_i32_1 = arith.constant 0 : i32
    return %c0_i32, %c0_i32_0 : i32, i32
  }
  func.func @transform_3(%arg0: i32) -> (i32, i32) {
    %c0_i32 = arith.constant 0 : i32
    %c0_i32_0 = arith.constant 0 : i32
    %c0_i32_1 = arith.constant 0 : i32
    return %c0_i32, %c0_i32_0 : i32, i32
  }
  func.func @transform_4(%arg0: i32) -> (i32, i32) {
    %c0_i32 = arith.constant 0 : i32
    %c0_i32_0 = arith.constant 0 : i32
    %c0_i32_1 = arith.constant 0 : i32
    return %c0_i32, %c0_i32_0 : i32, i32
  }
  func.func @transform_5(%arg0: i32) -> (i32, i32) {
    %c0_i32 = arith.constant 0 : i32
    %c0_i32_0 = arith.constant 0 : i32
    %c0_i32_1 = arith.constant 0 : i32
    return %c0_i32, %c0_i32_0 : i32, i32
  }
  func.func @transform_6(%arg0: i32) -> (i32, i32) {
    %c0_i32 = arith.constant 0 : i32
    %c0_i32_0 = arith.constant 0 : i32
    %c0_i32_1 = arith.constant 0 : i32
    return %c0_i32, %c0_i32_0 : i32, i32
  }
  func.func @transform_7(%arg0: i32) -> (i32, i32) {
    %c0_i32 = arith.constant 0 : i32
    %c0_i32_0 = arith.constant 0 : i32
    %c0_i32_1 = arith.constant 0 : i32
    return %c0_i32, %c0_i32_0 : i32, i32
  }
  func.func @transform_8(%arg0: i32) -> (i32, i32) {
    %c0_i32 = arith.constant 0 : i32
    %c0_i32_0 = arith.constant 0 : i32
    return %arg0, %c0_i32 : i32, i32
  }
}

</mosaic_0001>

<llo_original>
// kernel: tpu_custom_call.1
$region0: #{tpu_custom_call.1}
  #allocation0 [shape = 'u32[]', space=smem, size = 0x4, offset = 0x4, fixed_abs, tag = 'smem constant byte address 0x4 - core index']
  #allocation1 [shape = 'u32[144,128]{1,0:T(1,128)}', space=vmem, size = 0x12000, scoped, tag = 'internal scratch']
  %s0 = inlined_call_operand.hbm [shape: f32[16,16,64], index: 0, kind: input, shape index: {}]
  %s1 = inlined_call_operand.hbm [shape: f32[16,16,64], index: 1, kind: input, shape index: {}]
  %s2 = inlined_call_operand.vmem [shape: f32[64,8], index: 2, kind: input, shape index: {}]
  %s3 = inlined_call_operand.vmem [shape: f32[1,8], index: 3, kind: input, shape index: {}]
  %s4 = inlined_call_operand.vmem [shape: f32[64,32], index: 4, kind: input, shape index: {}]
  %s5 = inlined_call_operand.vmem [shape: f32[1,32], index: 5, kind: input, shape index: {}]
  %s6 = inlined_call_operand.hbm [shape: f32[256,128], index: 6, kind: input, shape index: {}]
  %s7 = inlined_call_operand.vmem [shape: f32[1,128], index: 7, kind: input, shape index: {}]
  %s8 = inlined_call_operand.hbm [shape: f32[16,128], index: 8, kind: output, shape index: {}]
  %s9 = sld [smem:[#allocation0]]
  $region77: #{tpu_custom_call.1} parent=0
    _
  %s11 = ssub.s32 1, %s9
  %s12 = scalar_select 0, %s11, %s9
  $region1: #{tpu_custom_call.1} parent=0
    #allocation2 [shape = 'u8[131072]{0}', space=vmem, size = 0x20000, scoped, tag = 'input window, operand 0']
    #allocation3 [shape = 's32[2]{0}', space=sflag, size = 0x8, scoped, tag = 'scoped memory for tpu_custom_call.1']
    #allocation4 [shape = 's32[2]{0}', space=sflag, size = 0x8, scoped, tag = 'scoped memory for tpu_custom_call.1']
    #allocation5 [shape = 'u8[131072]{0}', space=vmem, size = 0x20000, scoped, tag = 'input window, operand 1']
    #allocation6 [shape = 's32[2]{0}', space=sflag, size = 0x8, scoped, tag = 'scoped memory for tpu_custom_call.1']
    #allocation7 [shape = 'u8[131072]{0}', space=vmem, size = 0x20000, scoped, tag = 'input window, operand 6, single buffered']
    #allocation8 [shape = 'u8[8192]{0}', space=vmem, size = 0x2000, scoped, tag = 'output window, operand 0']
    %13 = vsyncpa [#allocation3], 0
    %s14 = scalar_lea.sflag [#allocation3], 1
    %15 = vsyncpa %s14, 0
    %16 = vsyncpa [#allocation6], 0
    %s17 = scalar_lea.sflag [#allocation6], 1
    %18 = vsyncpa %s17, 0
    %19 = vsyncpa [#allocation4], 0
    %s20 = scalar_lea.sflag [#allocation4], 1
    %21 = vsyncpa %s20, 0
    loop: start=0, step=1, limit=4
    $region2: #{tpu_custom_call.1} parent=1 // loop_pre_header
      _
    $region3: #{tpu_custom_call.1} parent=1 // loop_header
      %s23 = sphi 0, %s27
      %p24 = scmp.ge.s32.totalorder %s23, 4
      %s33 = sphi 0, %s35
      %s36 = sphi 0, %s33
      %s37 = sphi 0, %s36
      %s53 = sphi 0, %s37
      %s59 = sphi 0, %s61
      %s62 = sphi 0, %s59
      %s63 = sphi 0, %s62
      %s79 = sphi 0, %s63
      %s83 = sphi 0, %s83
      %s85 = sphi 0, %s83
      %s86 = sphi 0, %s85
      %s100 = sphi 0, %s86
      %s104 = sphi 0, %s104
      %s106 = sphi 0, %s104
      %s107 = sphi 0, %s106
      %s121 = sphi 0, %s107
      %s125 = sphi 0, %s125
      %s127 = sphi 0, %s125
      %s128 = sphi 0, %s127
      %s142 = sphi 0, %s128
      %s146 = sphi 0, %s146
      %s148 = sphi 0, %s146
      %s149 = sphi 0, %s148
      %s163 = sphi 0, %s149
      %s167 = sphi 0, %s167
      %s169 = sphi 0, %s167
      %s170 = sphi 0, %s169
      %s184 = sphi 0, %s170
      %s188 = sphi 0, %s188
      %s190 = sphi 0, %s188
      %s191 = sphi 0, %s190
      %s205 = sphi 0, %s191
      %s211 = sphi 0, %s213
      %s214 = sphi 0, %s211
      %s215 = sphi 0, %s214
      %s231 = sphi 0, %s215
    $region4: #{tpu_custom_call.1} parent=1 // loop_header_branch
      %26 = sbr.rel (%p24) target = $region8
    $region5: #{tpu_custom_call.1} parent=1 // loop_body
      %s28 = ssub.s32 %s23, 1
      %s29 = ssub.s32 %s23, 2
      %s30 = sadd.s32 %s23, 1
      %s31 = ssub.s32 %s23, %s30
      %p32 = scmp.eq.s32.totalorder %s31, 0
      %s34 = sadd.s32 %s33, 1
      %s35 = scalar_select %p32, %s33, %s34
      %p38 = pneg %p32
      %p39 = scmp.eq.s32.totalorder %s23, 1
      %p40 = por %p38, %p39
      %p41 = scmp.ne.s32.totalorder %s33, %s36
      %p42 = scmp.eq.s32.totalorder %s23, 0
      %p43 = por %p41, %p42
      %p44 = scmp.ne.s32.totalorder %s33, %s36
      %p45 = scmp.eq.s32.totalorder %s28, 1
      %p46 = por %p44, %p45
      %p47 = scmp.ne.s32.totalorder %s36, %s37
      %p48 = scmp.eq.s32.totalorder %s28, 0
      %p49 = por %p47, %p48
      %p50 = scmp.ne.s32.totalorder %s36, %s37
      %p51 = scmp.eq.s32.totalorder %s29, 1
      %p52 = por %p50, %p51
      %p54 = scmp.ne.s32.totalorder %s37, %s53
      %p55 = scmp.eq.s32.totalorder %s29, 0
      %p56 = por %p54, %p55
      %s57 = ssub.s32 %s23, %s30
      %p58 = scmp.eq.s32.totalorder %s57, 0
      %s60 = sadd.s32 %s59, 1
      %s61 = scalar_select %p58, %s59, %s60
      %p64 = pneg %p58
      %p65 = scmp.eq.s32.totalorder %s23, 1
      %p66 = por %p64, %p65
      %p67 = scmp.ne.s32.totalorder %s59, %s62
      %p68 = scmp.eq.s32.totalorder %s23, 0
      %p69 = por %p67, %p68
      %p70 = scmp.ne.s32.totalorder %s59, %s62
      %p71 = scmp.eq.s32.totalorder %s28, 1
      %p72 = por %p70, %p71
      %p73 = scmp.ne.s32.totalorder %s62, %s63
      %p74 = scmp.eq.s32.totalorder %s28, 0
      %p75 = por %p73, %p74
      %p76 = scmp.ne.s32.totalorder %s62, %s63
      %p77 = scmp.eq.s32.totalorder %s29, 1
      %p78 = por %p76, %p77
      %p80 = scmp.ne.s32.totalorder %s63, %s79
      %p81 = scmp.eq.s32.totalorder %s29, 0
      %p82 = por %p80, %p81
      %s84 = sadd.s32 %s83, 1
      %p87 = scmp.eq.s32.totalorder %s23, 1
      %p88 = scmp.ne.s32.totalorder %s83, %s85
      %p89 = scmp.eq.s32.totalorder %s23, 0
      %p90 = por %p88, %p89
      %p91 = scmp.ne.s32.totalorder %s83, %s85
      %p92 = scmp.eq.s32.totalorder %s28, 1
      %p93 = por %p91, %p92
      %p94 = scmp.ne.s32.totalorder %s85, %s86
      %p95 = scmp.eq.s32.totalorder %s28, 0
      %p96 = por %p94, %p95
      %p97 = scmp.ne.s32.totalorder %s85, %s86
      %p98 = scmp.eq.s32.totalorder %s29, 1
      %p99 = por %p97, %p98
      %p101 = scmp.ne.s32.totalorder %s86, %s100
      %p102 = scmp.eq.s32.totalorder %s29, 0
      %p103 = por %p101, %p102
      %s105 = sadd.s32 %s104, 1
      %p108 = scmp.eq.s32.totalorder %s23, 1
      %p109 = scmp.ne.s32.totalorder %s104, %s106
      %p110 = scmp.eq.s32.totalorder %s23, 0
      %p111 = por %p109, %p110
      %p112 = scmp.ne.s32.totalorder %s104, %s106
      %p113 = scmp.eq.s32.totalorder %s28, 1
      %p114 = por %p112, %p113
      %p115 = scmp.ne.s32.totalorder %s106, %s107
      %p116 = scmp.eq.s32.totalorder %s28, 0
      %p117 = por %p115, %p116
      %p118 = scmp.ne.s32.totalorder %s106, %s107
      %p119 = scmp.eq.s32.totalorder %s29, 1
      %p120 = por %p118, %p119
      %p122 = scmp.ne.s32.totalorder %s107, %s121
      %p123 = scmp.eq.s32.totalorder %s29, 0
      %p124 = por %p122, %p123
      %s126 = sadd.s32 %s125, 1
      %p129 = scmp.eq.s32.totalorder %s23, 1
      %p130 = scmp.ne.s32.totalorder %s125, %s127
      %p131 = scmp.eq.s32.totalorder %s23, 0
      %p132 = por %p130, %p131
      %p133 = scmp.ne.s32.totalorder %s125, %s127
      %p134 = scmp.eq.s32.totalorder %s28, 1
      %p135 = por %p133, %p134
      %p136 = scmp.ne.s32.totalorder %s127, %s128
      %p137 = scmp.eq.s32.totalorder %s28, 0
      %p138 = por %p136, %p137
      %p139 = scmp.ne.s32.totalorder %s127, %s128
      %p140 = scmp.eq.s32.totalorder %s29, 1
      %p141 = por %p139, %p140
      %p143 = scmp.ne.s32.totalorder %s128, %s142
      %p144 = scmp.eq.s32.totalorder %s29, 0
      %p145 = por %p143, %p144
      %s147 = sadd.s32 %s146, 1
      %p150 = scmp.eq.s32.totalorder %s23, 1
      %p151 = scmp.ne.s32.totalorder %s146, %s148
      %p152 = scmp.eq.s32.totalorder %s23, 0
      %p153 = por %p151, %p152
      %p154 = scmp.ne.s32.totalorder %s146, %s148
      %p155 = scmp.eq.s32.totalorder %s28, 1
      %p156 = por %p154, %p155
      %p157 = scmp.ne.s32.totalorder %s148, %s149
      %p158 = scmp.eq.s32.totalorder %s28, 0
      %p159 = por %p157, %p158
      %p160 = scmp.ne.s32.totalorder %s148, %s149
      %p161 = scmp.eq.s32.totalorder %s29, 1
      %p162 = por %p160, %p161
      %p164 = scmp.ne.s32.totalorder %s149, %s163
      %p165 = scmp.eq.s32.totalorder %s29, 0
      %p166 = por %p164, %p165
      %s168 = sadd.s32 %s167, 1
      %p171 = scmp.eq.s32.totalorder %s23, 1
      %p172 = scmp.ne.s32.totalorder %s167, %s169
      %p173 = scmp.eq.s32.totalorder %s23, 0
      %p174 = por %p172, %p173
      %p175 = scmp.ne.s32.totalorder %s167, %s169
      %p176 = scmp.eq.s32.totalorder %s28, 1
      %p177 = por %p175, %p176
      %p178 = scmp.ne.s32.totalorder %s169, %s170
      %p179 = scmp.eq.s32.totalorder %s28, 0
      %p180 = por %p178, %p179
      %p181 = scmp.ne.s32.totalorder %s169, %s170
      %p182 = scmp.eq.s32.totalorder %s29, 1
      %p183 = por %p181, %p182
      %p185 = scmp.ne.s32.totalorder %s170, %s184
      %p186 = scmp.eq.s32.totalorder %s29, 0
      %p187 = por %p185, %p186
      %s189 = sadd.s32 %s188, 1
      %p192 = scmp.eq.s32.totalorder %s23, 1
      %p193 = scmp.ne.s32.totalorder %s188, %s190
      %p194 = scmp.eq.s32.totalorder %s23, 0
      %p195 = por %p193, %p194
      %p196 = scmp.ne.s32.totalorder %s188, %s190
      %p197 = scmp.eq.s32.totalorder %s28, 1
      %p198 = por %p196, %p197
      %p199 = scmp.ne.s32.totalorder %s190, %s191
      %p200 = scmp.eq.s32.totalorder %s28, 0
      %p201 = por %p199, %p200
      %p202 = scmp.ne.s32.totalorder %s190, %s191
      %p203 = scmp.eq.s32.totalorder %s29, 1
      %p204 = por %p202, %p203
      %p206 = scmp.ne.s32.totalorder %s191, %s205
      %p207 = scmp.eq.s32.totalorder %s29, 0
      %p208 = por %p206, %p207
      %s209 = ssub.s32 %s23, %s30
      %p210 = scmp.eq.s32.totalorder %s209, 0
      %s212 = sadd.s32 %s211, 1
      %s213 = scalar_select %p210, %s211, %s212
      %p216 = pneg %p210
      %p217 = scmp.eq.s32.totalorder %s23, 1
      %p218 = por %p216, %p217
      %p219 = scmp.ne.s32.totalorder %s211, %s214
      %p220 = scmp.eq.s32.totalorder %s23, 0
      %p221 = por %p219, %p220
      %p222 = scmp.ne.s32.totalorder %s211, %s214
      %p223 = scmp.eq.s32.totalorder %s28, 1
      %p224 = por %p222, %p223
      %p225 = scmp.ne.s32.totalorder %s214, %s215
      %p226 = scmp.eq.s32.totalorder %s28, 0
      %p227 = por %p225, %p226
      %p228 = scmp.ne.s32.totalorder %s214, %s215
      %p229 = scmp.eq.s32.totalorder %s29, 1
      %p230 = por %p228, %p229
      %p232 = scmp.ne.s32.totalorder %s215, %s231
      %p233 = scmp.eq.s32.totalorder %s29, 0
      %p234 = por %p232, %p233
      %p235 = scmp.le.s32.totalorder 1, %s23
      %p236 = scmp.lt.s32.totalorder %s23, 3
      %p237 = pnand %p235, %p236
      %p238 = pneg %p237
      // Predicated region
      $region9: #{tpu_custom_call.1} parent=5 // pred_check
        _
      $region10: #{tpu_custom_call.1} parent=5 // pred_check_branch
        %240 = sbr.rel (%p237) target = $region12
      $region11: #{tpu_custom_call.1} parent=5 // pred_region
        %s241 = ssub.s32 %s23, 1
        // Predicated region
        $region13: #{tpu_custom_call.1} parent=11 // pred_check
          %p242 = pneg %p96
        $region14: #{tpu_custom_call.1} parent=11 // pred_check_branch
          %244 = sbr.rel (%p242) target = $region16
        $region15: #{tpu_custom_call.1} parent=11 // pred_region
          _
        $region16: #{tpu_custom_call.1} parent=11 // pred_fallthru
          _
        // Predicated region
        $region17: #{tpu_custom_call.1} parent=11 // pred_check
          %p245 = pneg %p117
        $region18: #{tpu_custom_call.1} parent=11 // pred_check_branch
          %247 = sbr.rel (%p245) target = $region20
        $region19: #{tpu_custom_call.1} parent=11 // pred_region
          _
        $region20: #{tpu_custom_call.1} parent=11 // pred_fallthru
          _
        // Predicated region
        $region21: #{tpu_custom_call.1} parent=11 // pred_check
          %p248 = pneg %p138
        $region22: #{tpu_custom_call.1} parent=11 // pred_check_branch
          %250 = sbr.rel (%p248) target = $region24
        $region23: #{tpu_custom_call.1} parent=11 // pred_region
          _
        $region24: #{tpu_custom_call.1} parent=11 // pred_fallthru
          _
        // Predicated region
        $region25: #{tpu_custom_call.1} parent=11 // pred_check
          %p251 = pneg %p159
        $region26: #{tpu_custom_call.1} parent=11 // pred_check_branch
          %253 = sbr.rel (%p251) target = $region28
        $region27: #{tpu_custom_call.1} parent=11 // pred_region
          _
        $region28: #{tpu_custom_call.1} parent=11 // pred_fallthru
          _
        // Predicated region
        $region29: #{tpu_custom_call.1} parent=11 // pred_check
          %p254 = pneg %p180
        $region30: #{tpu_custom_call.1} parent=11 // pred_check_branch
          %256 = sbr.rel (%p254) target = $region32
        $region31: #{tpu_custom_call.1} parent=11 // pred_region
          %s258 = ssub.s32 4096, 4096
          %259 = vsyncadd [#allocation6], %s258
          %s260 = sshll.u32 [#allocation7], 4
          %s261 = int_to_ptr.vmem [resolvable:$true] %s260
          %266 = dma.hbm_to_vmem [thread:$0]  %s6, 4096, %s261, [#allocation6], 128, 128, 8
        $region32: #{tpu_custom_call.1} parent=11 // pred_fallthru
          _
        // Predicated region
        $region33: #{tpu_custom_call.1} parent=11 // pred_check
          %p267 = pneg %p201
        $region34: #{tpu_custom_call.1} parent=11 // pred_check_branch
          %269 = sbr.rel (%p267) target = $region36
        $region35: #{tpu_custom_call.1} parent=11 // pred_region
          _
        $region36: #{tpu_custom_call.1} parent=11 // pred_fallthru
          _
      $region12: #{tpu_custom_call.1} parent=5 // pred_fallthru
        _
      %p270 = scmp.lt.s32.totalorder %s23, 2
      // Predicated region
      $region37: #{tpu_custom_call.1} parent=5 // pred_check
        %p271 = pneg %p270
      $region38: #{tpu_custom_call.1} parent=5 // pred_check_branch
        %273 = sbr.rel (%p271) target = $region40
      $region39: #{tpu_custom_call.1} parent=5 // pred_region
        // Predicated region
        $region41: #{tpu_custom_call.1} parent=39 // pred_check
          %p274 = pneg %p43
        $region42: #{tpu_custom_call.1} parent=39 // pred_check_branch
          %276 = sbr.rel (%p274) target = $region44
        $region43: #{tpu_custom_call.1} parent=39 // pred_region
          %s277 = sand.u32 %s33, 1
          %s278 = scalar_lea.sflag [#allocation3], %s277
          %s279 = sand.u32 %s33, 1
          %s280 = smul.addr %s279, 128
          %s281 = scalar_lea.vmem [#allocation2], %s280
          %s282 = smul.u32 8, %s23
          %s284 = ssub.s32 2048, 2048
          %285 = vsyncadd %s278, %s284
          %s286 = smul.addr %s282, 2
          %s287 = smul.addr %s286, 128
          %s288 = scalar_lea.hbm %s0, %s287
          %s289 = sshll.u32 %s281, 4
          %s290 = int_to_ptr.vmem [resolvable:$true] %s289
          %295 = dma.hbm_to_vmem [thread:$0]  %s288, 2048, %s290, %s278, 128, 128, 8
        $region44: #{tpu_custom_call.1} parent=39 // pred_fallthru
          _
        // Predicated region
        $region45: #{tpu_custom_call.1} parent=39 // pred_check
          %p296 = pneg %p69
        $region46: #{tpu_custom_call.1} parent=39 // pred_check_branch
          %298 = sbr.rel (%p296) target = $region48
        $region47: #{tpu_custom_call.1} parent=39 // pred_region
          %s299 = sand.u32 %s23, 1
          %s300 = scalar_lea.sflag [#allocation6], %s299
          %s301 = sand.u32 %s59, 1
          %s302 = smul.addr %s301, 128
          %s303 = scalar_lea.vmem [#allocation5], %s302
          %s304 = smul.u32 8, %s23
          %s306 = ssub.s32 2048, 2048
          %307 = vsyncadd %s300, %s306
          %s308 = smul.addr %s304, 2
          %s309 = smul.addr %s308, 128
          %s310 = scalar_lea.hbm %s1, %s309
          %s311 = sshll.u32 %s303, 4
          %s312 = int_to_ptr.vmem [resolvable:$true] %s311
          %317 = dma.hbm_to_vmem [thread:$0]  %s310, 2048, %s312, %s300, 128, 128, 8
        $region48: #{tpu_custom_call.1} parent=39 // pred_fallthru
          _
      $region40: #{tpu_custom_call.1} parent=5 // pred_fallthru
        _
      %p318 = scmp.le.s32.totalorder 1, %s23
      %p319 = scmp.lt.s32.totalorder %s23, 3
      %p320 = pnand %p318, %p319
      %p321 = pneg %p320
      // Predicated region
      $region49: #{tpu_custom_call.1} parent=5 // pred_check
        _
      $region50: #{tpu_custom_call.1} parent=5 // pred_check_branch
        %323 = sbr.rel (%p320) target = $region52
      $region51: #{tpu_custom_call.1} parent=5 // pred_region
        %s324 = ssub.s32 %s23, 1
        %s325 = sand.u32 %s36, 1
        %s326 = scalar_lea.sflag [#allocation3], %s325
        %s327 = sand.u32 %s36, 1
        %s328 = smul.addr %s327, 128
        %s329 = scalar_lea.vmem [#allocation2], %s328
        // Predicated region
        $region53: #{tpu_custom_call.1} parent=51 // pred_check
          %p330 = pneg %p49
        $region54: #{tpu_custom_call.1} parent=51 // pred_check_branch
          %332 = sbr.rel (%p330) target = $region56
        $region55: #{tpu_custom_call.1} parent=51 // pred_region
          %333 = dma.done %s326, 2048
        $region56: #{tpu_custom_call.1} parent=51 // pred_fallthru
          _
        %s334 = sand.u32 %s28, 1
        %s335 = scalar_lea.sflag [#allocation6], %s334
        %s336 = sand.u32 %s62, 1
        %s337 = smul.addr %s336, 128
        %s338 = scalar_lea.vmem [#allocation5], %s337
        // Predicated region
        $region57: #{tpu_custom_call.1} parent=51 // pred_check
          %p339 = pneg %p75
        $region58: #{tpu_custom_call.1} parent=51 // pred_check_branch
          %341 = sbr.rel (%p339) target = $region60
        $region59: #{tpu_custom_call.1} parent=51 // pred_region
          %342 = dma.done %s335, 2048
        $region60: #{tpu_custom_call.1} parent=51 // pred_fallthru
          _
        // Predicated region
        $region61: #{tpu_custom_call.1} parent=51 // pred_check
          %p343 = pneg %p180
        $region62: #{tpu_custom_call.1} parent=51 // pred_check_branch
          %345 = sbr.rel (%p343) target = $region64
        $region63: #{tpu_custom_call.1} parent=51 // pred_region
          %346 = dma.done [#allocation6], 4096
        $region64: #{tpu_custom_call.1} parent=51 // pred_fallthru
          _
        %s347 = sand.u32 %s36, 1
        %s348 = scalar_lea.sflag [#allocation3], %s347
        %s349 = sand.u32 %s36, 1
        %s350 = smul.addr %s349, 128
        %s351 = scalar_lea.vmem [#allocation2], %s350
        %p352 = pneg %p49
        %p353 = pneg %p46
        %s354 = sand.u32 %s28, 1
        %s355 = scalar_lea.sflag [#allocation6], %s354
        %s356 = sand.u32 %s62, 1
        %s357 = smul.addr %s356, 128
        %s358 = scalar_lea.vmem [#allocation5], %s357
        %p359 = pneg %p75
        %p360 = pneg %p72
        %p361 = pneg %p96
        %p362 = pneg %p93
        %p363 = pneg %p117
        %p364 = pneg %p114
        %p365 = pneg %p138
        %p366 = pneg %p135
        %p367 = pneg %p159
        %p368 = pneg %p156
        %p369 = pneg %p180
        %p370 = pneg %p177
        %p371 = pneg %p201
        %p372 = pneg %p198
        %p373 = pneg %p227
        %p374 = pneg %p224
        %s375 = sand.u32 %s214, 1
        %s376 = scalar_lea.sflag [#allocation4], %s375
        %s377 = sand.u32 %s214, 1
        %s378 = smul.addr %s377, 8
        %s379 = scalar_lea.vmem [#allocation8], %s378
        %s380 = smul.u32 8, %s28
        %s381 = smul.u32 8, %s28
        %v382 = vld [vmem:[%s329] sm:$0xff]
        %v383 = vld [vmem:[%s329 + $0x8] sm:$0xff]
        %v384 = vld [vmem:[%s329 + $0x10] sm:$0xff]
        %v385 = vld [vmem:[%s329 + $0x18] sm:$0xff]
        %v386 = vld [vmem:[%s329 + $0x20] sm:$0xff]
        %v387 = vld [vmem:[%s329 + $0x28] sm:$0xff]
        %v388 = vld [vmem:[%s329 + $0x30] sm:$0xff]
        %v389 = vld [vmem:[%s329 + $0x38] sm:$0xff]
        %v390 = vld [vmem:[%s329 + $0x40] sm:$0xff]
        %v391 = vld [vmem:[%s329 + $0x48] sm:$0xff]
        %v392 = vld [vmem:[%s329 + $0x50] sm:$0xff]
        %v393 = vld [vmem:[%s329 + $0x58] sm:$0xff]
        %v394 = vld [vmem:[%s329 + $0x60] sm:$0xff]
        %v395 = vld [vmem:[%s329 + $0x68] sm:$0xff]
        %v396 = vld [vmem:[%s329 + $0x70] sm:$0xff]
        %v397 = vld [vmem:[%s329 + $0x78] sm:$0xff]
        %v398 = vld [vmem:[%s338] sm:$0xff]
        %v399 = vld [vmem:[%s338 + $0x8] sm:$0xff]
        %v400 = vld [vmem:[%s338 + $0x10] sm:$0xff]
        %v401 = vld [vmem:[%s338 + $0x18] sm:$0xff]
        %v402 = vld [vmem:[%s338 + $0x20] sm:$0xff]
        %v403 = vld [vmem:[%s338 + $0x28] sm:$0xff]
        %v404 = vld [vmem:[%s338 + $0x30] sm:$0xff]
        %v405 = vld [vmem:[%s338 + $0x38] sm:$0xff]
        %v406 = vld [vmem:[%s338 + $0x40] sm:$0xff]
        %v407 = vld [vmem:[%s338 + $0x48] sm:$0xff]
        %v408 = vld [vmem:[%s338 + $0x50] sm:$0xff]
        %v409 = vld [vmem:[%s338 + $0x58] sm:$0xff]
        %v410 = vld [vmem:[%s338 + $0x60] sm:$0xff]
        %v411 = vld [vmem:[%s338 + $0x68] sm:$0xff]
        %v412 = vld [vmem:[%s338 + $0x70] sm:$0xff]
        %v413 = vld [vmem:[%s338 + $0x78] sm:$0xff]
        %v414 = vld [vmem:[%s2] sm:$0xff]
        %v415 = vld [vmem:[%s2 + $0x8] sm:$0xff]
        %v416 = vld [vmem:[%s2 + $0x10] sm:$0xff]
        %v417 = vld [vmem:[%s2 + $0x18] sm:$0xff]
        %v418 = vld [vmem:[%s2 + $0x20] sm:$0xff]
        %v419 = vld [vmem:[%s2 + $0x28] sm:$0xff]
        %v420 = vld [vmem:[%s2 + $0x30] sm:$0xff]
        %v421 = vld [vmem:[%s2 + $0x38] sm:$0xff]
        %v422 = vld [vmem:[%s3] sm:$0x1]
        %v424 = vlaneseq
        %v425 = vshrl.u32 %v424, 7
        %v426 = vsub.s32 0, %v425
        %v427 = vrot.slane %v422, %v426
        %vm429 = vcmask 523264
        %v431 = vsel %vm429, %v382, 0
        %v434 = vsel %vm429, %v383, 0
        %v437 = vsel %vm429, %v384, 0
        %v440 = vsel %vm429, %v385, 0
        %v443 = vsel %vm429, %v386, 0
        %v446 = vsel %vm429, %v387, 0
        %v449 = vsel %vm429, %v388, 0
        %v452 = vsel %vm429, %v389, 0
        %v455 = vsel %vm429, %v390, 0
        %v458 = vsel %vm429, %v391, 0
        %v461 = vsel %vm429, %v392, 0
        %v464 = vsel %vm429, %v393, 0
        %v467 = vsel %vm429, %v394, 0
        %v470 = vsel %vm429, %v395, 0
        %v473 = vsel %vm429, %v396, 0
        %v476 = vsel %vm429, %v397, 0
        %478 = vmatprep.subr.mxu0 0.0
        %479 = vmatpush1.msra.mxu0 %v414
        %480 = vmatprep.subr.mxu0 0.0
        %481 = vmatpush1.msra.mxu0 %v415
        %482 = vmatprep.subr.mxu0 0.0
        %483 = vmatpush1.msra.mxu0 %v416
        %484 = vmatprep.subr.mxu0 0.0
        %485 = vmatpush1.msra.mxu0 %v417
        %486 = vmatprep.subr.mxu0 0.0
        %487 = vmatpush1.msra.mxu0 %v418
        %488 = vmatprep.subr.mxu0 0.0
        %489 = vmatpush1.msra.mxu0 %v419
        %490 = vmatprep.subr.mxu0 0.0
        %491 = vmatpush1.msra.mxu0 %v420
        %492 = vmatprep.subr.mxu0 0.0
        %493 = vmatpush1.msra.mxu0 %v421
        %494 = vmatprep.subr.mxu0 0.0
        %495 = vmatpush1.msra.mxu0 0.0
        %496 = vmatprep.subr.mxu0 0.0
        %497 = vmatpush1.msra.mxu0 0.0
        %498 = vmatprep.subr.mxu0 0.0
        %499 = vmatpush1.msra.mxu0 0.0
        %500 = vmatprep.subr.mxu0 0.0
        %501 = vmatpush1.msra.mxu0 0.0
        %502 = vmatprep.subr.mxu0 0.0
        %503 = vmatpush1.msra.mxu0 0.0
        %504 = vmatprep.subr.mxu0 0.0
        %505 = vmatpush1.msra.mxu0 0.0
        %506 = vmatprep.subr.mxu0 0.0
        %507 = vmatpush1.msra.mxu0 0.0
        %508 = vmatprep.subr.mxu0 0.0
        %509 = vmatpush1.msra.mxu0 0.0
        %510 = vmatprep.subr.mxu0 0.0
        %511 = vmatpush1.msra.mxu0 0.0
        %512 = vmatprep.subr.mxu0 0.0
        %513 = vmatpush1.msra.mxu0 0.0
        %514 = vmatprep.subr.mxu0 0.0
        %515 = vmatpush1.msra.mxu0 0.0
        %516 = vmatprep.subr.mxu0 0.0
        %517 = vmatpush1.msra.mxu0 0.0
        %518 = vmatprep.subr.mxu0 0.0
        %519 = vmatpush1.msra.mxu0 0.0
        %520 = vmatprep.subr.mxu0 0.0
        %521 = vmatpush1.msra.mxu0 0.0
        %522 = vmatprep.subr.mxu0 0.0
        %523 = vmatpush1.msra.mxu0 0.0
        %524 = vmatprep.subr.mxu0 0.0
        %525 = vmatpush1.msra.mxu0 0.0
        %526 = vmatprep.subr.mxu0 0.0
        %527 = vmatpush1.msra.mxu0 0.0
        %528 = vmatprep.subr.mxu0 0.0
        %529 = vmatpush1.msra.mxu0 0.0
        %530 = vmatprep.subr.mxu0 0.0
        %531 = vmatpush1.msra.mxu0 0.0
        %532 = vmatprep.subr.mxu0 0.0
        %533 = vmatpush1.msra.mxu0 0.0
        %534 = vmatprep.subr.mxu0 0.0
        %535 = vmatpush1.msra.mxu0 0.0
        %536 = vmatprep.subr.mxu0 0.0
        %537 = vmatpush1.msra.mxu0 0.0
        %538 = vmatprep.subr.mxu0 0.0
        %539 = vmatpush1.msra.mxu0 0.0
        %540 = vmatprep.subr.mxu0 0.0
        %541 = vmatpush1.msra.mxu0 0.0
        %542 = vmatprep.mubr.f32.mxu0 0.0
        %543 = vmatmul.mubr.f32.gmra.mrb[0].mxu0 %v431
        %v544 = vpop.f32.mrb[0].mxu0
        %v545 = vadd.f32 %v427, %v544
        %v546 = vpop.f32.mrb[0].mxu0
        %547 = vmatprep.mubr.f32.mxu0 0.0
        %548 = vmatmul.mubr.f32.gmra.mrb[0].mxu0 %v434
        %v549 = vpop.f32.mrb[0].mxu0
        %v550 = vadd.f32 %v427, %v549
        %v551 = vpop.f32.mrb[0].mxu0
        %552 = vmatprep.mubr.f32.mxu0 0.0
        %553 = vmatmul.mubr.f32.gmra.mrb[0].mxu0 %v437
        %v554 = vpop.f32.mrb[0].mxu0
        %v555 = vadd.f32 %v427, %v554
        %v556 = vpop.f32.mrb[0].mxu0
        %557 = vmatprep.mubr.f32.mxu0 0.0
        %558 = vmatmul.mubr.f32.gmra.mrb[0].mxu0 %v440
        %v559 = vpop.f32.mrb[0].mxu0
        %v560 = vadd.f32 %v427, %v559
        %v561 = vpop.f32.mrb[0].mxu0
        %562 = vmatprep.mubr.f32.mxu0 0.0
        %563 = vmatmul.mubr.f32.gmra.mrb[0].mxu0 %v443
        %v564 = vpop.f32.mrb[0].mxu0
        %v565 = vadd.f32 %v427, %v564
        %v566 = vpop.f32.mrb[0].mxu0
        %567 = vmatprep.mubr.f32.mxu0 0.0
        %568 = vmatmul.mubr.f32.gmra.mrb[0].mxu0 %v446
        %v569 = vpop.f32.mrb[0].mxu0
        %v570 = vadd.f32 %v427, %v569
        %v571 = vpop.f32.mrb[0].mxu0
        %572 = vmatprep.mubr.f32.mxu0 0.0
        %573 = vmatmul.mubr.f32.gmra.mrb[0].mxu0 %v449
        %v574 = vpop.f32.mrb[0].mxu0
        %v575 = vadd.f32 %v427, %v574
        %v576 = vpop.f32.mrb[0].mxu0
        %577 = vmatprep.mubr.f32.mxu0 0.0
        %578 = vmatmul.mubr.f32.gmra.mrb[0].mxu0 %v452
        %v579 = vpop.f32.mrb[0].mxu0
        %v580 = vadd.f32 %v427, %v579
        %v581 = vpop.f32.mrb[0].mxu0
        %582 = vmatprep.mubr.f32.mxu0 0.0
        %583 = vmatmul.mubr.f32.gmra.mrb[0].mxu0 %v455
        %v584 = vpop.f32.mrb[0].mxu0
        %v585 = vadd.f32 %v427, %v584
        %v586 = vpop.f32.mrb[0].mxu0
        %587 = vmatprep.mubr.f32.mxu0 0.0
        %588 = vmatmul.mubr.f32.gmra.mrb[0].mxu0 %v458
        %v589 = vpop.f32.mrb[0].mxu0
        %v590 = vadd.f32 %v427, %v589
        %v591 = vpop.f32.mrb[0].mxu0
        %592 = vmatprep.mubr.f32.mxu0 0.0
        %593 = vmatmul.mubr.f32.gmra.mrb[0].mxu0 %v461
        %v594 = vpop.f32.mrb[0].mxu0
        %v595 = vadd.f32 %v427, %v594
        %v596 = vpop.f32.mrb[0].mxu0
        %597 = vmatprep.mubr.f32.mxu0 0.0
        %598 = vmatmul.mubr.f32.gmra.mrb[0].mxu0 %v464
        %v599 = vpop.f32.mrb[0].mxu0
        %v600 = vadd.f32 %v427, %v599
        %v601 = vpop.f32.mrb[0].mxu0
        %602 = vmatprep.mubr.f32.mxu0 0.0
        %603 = vmatmul.mubr.f32.gmra.mrb[0].mxu0 %v467
        %v604 = vpop.f32.mrb[0].mxu0
        %v605 = vadd.f32 %v427, %v604
        %v606 = vpop.f32.mrb[0].mxu0
        %607 = vmatprep.mubr.f32.mxu0 0.0
        %608 = vmatmul.mubr.f32.gmra.mrb[0].mxu0 %v470
        %v609 = vpop.f32.mrb[0].mxu0
        %v610 = vadd.f32 %v427, %v609
        %v611 = vpop.f32.mrb[0].mxu0
        %612 = vmatprep.mubr.f32.mxu0 0.0
        %613 = vmatmul.mubr.f32.gmra.mrb[0].mxu0 %v473
        %v614 = vpop.f32.mrb[0].mxu0
        %v615 = vadd.f32 %v427, %v614
        %v616 = vpop.f32.mrb[0].mxu0
        %617 = vmatprep.mubr.f32.mxu0 0.0
        %618 = vmatmul.mubr.f32.gmra.mrb[0].mxu0 %v476
        %v619 = vpop.f32.mrb[0].mxu0
        %v620 = vadd.f32 %v427, %v619
        %v621 = vpop.f32.mrb[0].mxu0
        %622 = vdwg.mxu0
        %v623 = vld [vmem:[%s4] sm:$0xff]
        %v624 = vld [vmem:[%s4 + $0x8] sm:$0xff]
        %v625 = vld [vmem:[%s4 + $0x10] sm:$0xff]
        %v626 = vld [vmem:[%s4 + $0x18] sm:$0xff]
        %v627 = vld [vmem:[%s4 + $0x20] sm:$0xff]
        %v628 = vld [vmem:[%s4 + $0x28] sm:$0xff]
        %v629 = vld [vmem:[%s4 + $0x30] sm:$0xff]
        %v630 = vld [vmem:[%s4 + $0x38] sm:$0xff]
        %v631 = vld [vmem:[%s5] sm:$0x1]
        %v633 = vlaneseq
        %v634 = vshrl.u32 %v633, 7
        %v635 = vsub.s32 0, %v634
        %v636 = vrot.slane %v631, %v635
        %v639 = vsel %vm429, %v398, 0
        %v642 = vsel %vm429, %v399, 0
        %v645 = vsel %vm429, %v400, 0
        %v648 = vsel %vm429, %v401, 0
        %v651 = vsel %vm429, %v402, 0
        %v654 = vsel %vm429, %v403, 0
        %v657 = vsel %vm429, %v404, 0
        %v660 = vsel %vm429, %v405, 0
        %v663 = vsel %vm429, %v406, 0
        %v666 = vsel %vm429, %v407, 0
        %v669 = vsel %vm429, %v408, 0
        %v672 = vsel %vm429, %v409, 0
        %v675 = vsel %vm429, %v410, 0
        %v678 = vsel %vm429, %v411, 0
        %v681 = vsel %vm429, %v412, 0
        %v684 = vsel %vm429, %v413, 0
        %686 = vmatprep.subr.mxu0 0.0
        %687 = vmatpush1.msra.mxu0 %v623
        %688 = vmatprep.subr.mxu0 0.0
        %689 = vmatpush1.msra.mxu0 %v624
        %690 = vmatprep.subr.mxu0 0.0
        %691 = vmatpush1.msra.mxu0 %v625
        %692 = vmatprep.subr.mxu0 0.0
        %693 = vmatpush1.msra.mxu0 %v626
        %694 = vmatprep.subr.mxu0 0.0
        %695 = vmatpush1.msra.mxu0 %v627
        %696 = vmatprep.subr.mxu0 0.0
        %697 = vmatpush1.msra.mxu0 %v628
        %698 = vmatprep.subr.mxu0 0.0
        %699 = vmatpush1.msra.mxu0 %v629
        %700 = vmatprep.subr.mxu0 0.0
        %701 = vmatpush1.msra.mxu0 %v630
        %702 = vmatprep.subr.mxu0 0.0
        %703 = vmatpush1.msra.mxu0 0.0
        %704 = vmatprep.subr.mxu0 0.0
        %705 = vmatpush1.msra.mxu0 0.0
        %706 = vmatprep.subr.mxu0 0.0
        %707 = vmatpush1.msra.mxu0 0.0
        %708 = vmatprep.subr.mxu0 0.0
        %709 = vmatpush1.msra.mxu0 0.0
        %710 = vmatprep.subr.mxu0 0.0
        %711 = vmatpush1.msra.mxu0 0.0
        %712 = vmatprep.subr.mxu0 0.0
        %713 = vmatpush1.msra.mxu0 0.0
        %714 = vmatprep.subr.mxu0 0.0
        %715 = vmatpush1.msra.mxu0 0.0
        %716 = vmatprep.subr.mxu0 0.0
        %717 = vmatpush1.msra.mxu0 0.0
        %718 = vmatprep.subr.mxu0 0.0
        %719 = vmatpush1.msra.mxu0 0.0
        %720 = vmatprep.subr.mxu0 0.0
        %721 = vmatpush1.msra.mxu0 0.0
        %722 = vmatprep.subr.mxu0 0.0
        %723 = vmatpush1.msra.mxu0 0.0
        %724 = vmatprep.subr.mxu0 0.0
        %725 = vmatpush1.msra.mxu0 0.0
        %726 = vmatprep.subr.mxu0 0.0
        %727 = vmatpush1.msra.mxu0 0.0
        %728 = vmatprep.subr.mxu0 0.0
        %729 = vmatpush1.msra.mxu0 0.0
        %730 = vmatprep.subr.mxu0 0.0
        %731 = vmatpush1.msra.mxu0 0.0
        %732 = vmatprep.subr.mxu0 0.0
        %733 = vmatpush1.msra.mxu0 0.0
        %734 = vmatprep.subr.mxu0 0.0
        %735 = vmatpush1.msra.mxu0 0.0
        %736 = vmatprep.subr.mxu0 0.0
        %737 = vmatpush1.msra.mxu0 0.0
        %738 = vmatprep.subr.mxu0 0.0
        %739 = vmatpush1.msra.mxu0 0.0
        %740 = vmatprep.subr.mxu0 0.0
        %741 = vmatpush1.msra.mxu0 0.0
        %742 = vmatprep.subr.mxu0 0.0
        %743 = vmatpush1.msra.mxu0 0.0
        %744 = vmatprep.subr.mxu0 0.0
        %745 = vmatpush1.msra.mxu0 0.0
        %746 = vmatprep.subr.mxu0 0.0
        %747 = vmatpush1.msra.mxu0 0.0
        %748 = vmatprep.subr.mxu0 0.0
        %749 = vmatpush1.msra.mxu0 0.0
        %750 = vmatprep.mubr.f32.mxu0 0.0
        %751 = vmatmul.mubr.f32.gmra.mrb[0].mxu0 %v639
        %v752 = vpop.f32.mrb[0].mxu0
        %v753 = vadd.f32 %v636, %v752
        %v754 = vpop.f32.mrb[0].mxu0
        %755 = vmatprep.mubr.f32.mxu0 0.0
        %756 = vmatmul.mubr.f32.gmra.mrb[0].mxu0 %v642
        %v757 = vpop.f32.mrb[0].mxu0
        %v758 = vadd.f32 %v636, %v757
        %v759 = vpop.f32.mrb[0].mxu0
        %760 = vmatprep.mubr.f32.mxu0 0.0
        %761 = vmatmul.mubr.f32.gmra.mrb[0].mxu0 %v645
        %v762 = vpop.f32.mrb[0].mxu0
        %v763 = vadd.f32 %v636, %v762
        %v764 = vpop.f32.mrb[0].mxu0
        %765 = vmatprep.mubr.f32.mxu0 0.0
        %766 = vmatmul.mubr.f32.gmra.mrb[0].mxu0 %v648
        %v767 = vpop.f32.mrb[0].mxu0
        %v768 = vadd.f32 %v636, %v767
        %v769 = vpop.f32.mrb[0].mxu0
        %770 = vmatprep.mubr.f32.mxu0 0.0
        %771 = vmatmul.mubr.f32.gmra.mrb[0].mxu0 %v651
        %v772 = vpop.f32.mrb[0].mxu0
        %v773 = vadd.f32 %v636, %v772
        %v774 = vpop.f32.mrb[0].mxu0
        %775 = vmatprep.mubr.f32.mxu0 0.0
        %776 = vmatmul.mubr.f32.gmra.mrb[0].mxu0 %v654
        %v777 = vpop.f32.mrb[0].mxu0
        %v778 = vadd.f32 %v636, %v777
        %v779 = vpop.f32.mrb[0].mxu0
        %780 = vmatprep.mubr.f32.mxu0 0.0
        %781 = vmatmul.mubr.f32.gmra.mrb[0].mxu0 %v657
        %v782 = vpop.f32.mrb[0].mxu0
        %v783 = vadd.f32 %v636, %v782
        %v784 = vpop.f32.mrb[0].mxu0
        %785 = vmatprep.mubr.f32.mxu0 0.0
        %786 = vmatmul.mubr.f32.gmra.mrb[0].mxu0 %v660
        %v787 = vpop.f32.mrb[0].mxu0
        %v788 = vadd.f32 %v636, %v787
        %v789 = vpop.f32.mrb[0].mxu0
        %790 = vmatprep.mubr.f32.mxu0 0.0
        %791 = vmatmul.mubr.f32.gmra.mrb[0].mxu0 %v663
        %v792 = vpop.f32.mrb[0].mxu0
        %v793 = vadd.f32 %v636, %v792
        %v794 = vpop.f32.mrb[0].mxu0
        %795 = vmatprep.mubr.f32.mxu0 0.0
        %796 = vmatmul.mubr.f32.gmra.mrb[0].mxu0 %v666
        %v797 = vpop.f32.mrb[0].mxu0
        %v798 = vadd.f32 %v636, %v797
        %v799 = vpop.f32.mrb[0].mxu0
        %800 = vmatprep.mubr.f32.mxu0 0.0
        %801 = vmatmul.mubr.f32.gmra.mrb[0].mxu0 %v669
        %v802 = vpop.f32.mrb[0].mxu0
        %v803 = vadd.f32 %v636, %v802
        %v804 = vpop.f32.mrb[0].mxu0
        %805 = vmatprep.mubr.f32.mxu0 0.0
        %806 = vmatmul.mubr.f32.gmra.mrb[0].mxu0 %v672
        %v807 = vpop.f32.mrb[0].mxu0
        %v808 = vadd.f32 %v636, %v807
        %v809 = vpop.f32.mrb[0].mxu0
        %810 = vmatprep.mubr.f32.mxu0 0.0
        %811 = vmatmul.mubr.f32.gmra.mrb[0].mxu0 %v675
        %v812 = vpop.f32.mrb[0].mxu0
        %v813 = vadd.f32 %v636, %v812
        %v814 = vpop.f32.mrb[0].mxu0
        %815 = vmatprep.mubr.f32.mxu0 0.0
        %816 = vmatmul.mubr.f32.gmra.mrb[0].mxu0 %v678
        %v817 = vpop.f32.mrb[0].mxu0
        %v818 = vadd.f32 %v636, %v817
        %v819 = vpop.f32.mrb[0].mxu0
        %820 = vmatprep.mubr.f32.mxu0 0.0
        %821 = vmatmul.mubr.f32.gmra.mrb[0].mxu0 %v681
        %v822 = vpop.f32.mrb[0].mxu0
        %v823 = vadd.f32 %v636, %v822
        %v824 = vpop.f32.mrb[0].mxu0
        %825 = vmatprep.mubr.f32.mxu0 0.0
        %826 = vmatmul.mubr.f32.gmra.mrb[0].mxu0 %v684
        %v827 = vpop.f32.mrb[0].mxu0
        %v828 = vadd.f32 %v636, %v827
        %v829 = vpop.f32.mrb[0].mxu0
        %830 = vdwg.mxu0
        %vm831 = vcmask 64512
        %v832 = vsel %vm831, %v545, -inf
        %v833 = vsel %vm831, %v550, -inf
        %v834 = vmax.f32 %v832, %v833
        %v835 = vrot.slane %v834, 4
        %v836 = vmax.f32 %v834, %v835
        %v837 = vrot.slane %v836, 2
        %v838 = vmax.f32 %v836, %v837
        %v839 = vrot.slane %v838, 1
        %v840 = vmax.f32 %v838, %v839
        %v841 = vsel %vm831, %v555, -inf
        %v842 = vsel %vm831, %v560, -inf
        %v843 = vmax.f32 %v841, %v842
        %v844 = vrot.slane %v843, 4
        %v845 = vmax.f32 %v843, %v844
        %v846 = vrot.slane %v845, 2
        %v847 = vmax.f32 %v845, %v846
        %v848 = vrot.slane %v847, 1
        %v849 = vmax.f32 %v847, %v848
        %v850 = vsel %vm831, %v565, -inf
        %v851 = vsel %vm831, %v570, -inf
        %v852 = vmax.f32 %v850, %v851
        %v853 = vrot.slane %v852, 4
        %v854 = vmax.f32 %v852, %v853
        %v855 = vrot.slane %v854, 2
        %v856 = vmax.f32 %v854, %v855
        %v857 = vrot.slane %v856, 1
        %v858 = vmax.f32 %v856, %v857
        %v859 = vsel %vm831, %v575, -inf
        %v860 = vsel %vm831, %v580, -inf
        %v861 = vmax.f32 %v859, %v860
        %v862 = vrot.slane %v861, 4
        %v863 = vmax.f32 %v861, %v862
        %v864 = vrot.slane %v863, 2
        %v865 = vmax.f32 %v863, %v864
        %v866 = vrot.slane %v865, 1
        %v867 = vmax.f32 %v865, %v866
        %v868 = vsel %vm831, %v585, -inf
        %v869 = vsel %vm831, %v590, -inf
        %v870 = vmax.f32 %v868, %v869
        %v871 = vrot.slane %v870, 4
        %v872 = vmax.f32 %v870, %v871
        %v873 = vrot.slane %v872, 2
        %v874 = vmax.f32 %v872, %v873
        %v875 = vrot.slane %v874, 1
        %v876 = vmax.f32 %v874, %v875
        %v877 = vsel %vm831, %v595, -inf
        %v878 = vsel %vm831, %v600, -inf
        %v879 = vmax.f32 %v877, %v878
        %v880 = vrot.slane %v879, 4
        %v881 = vmax.f32 %v879, %v880
        %v882 = vrot.slane %v881, 2
        %v883 = vmax.f32 %v881, %v882
        %v884 = vrot.slane %v883, 1
        %v885 = vmax.f32 %v883, %v884
        %v886 = vsel %vm831, %v605, -inf
        %v887 = vsel %vm831, %v610, -inf
        %v888 = vmax.f32 %v886, %v887
        %v889 = vrot.slane %v888, 4
        %v890 = vmax.f32 %v888, %v889
        %v891 = vrot.slane %v890, 2
        %v892 = vmax.f32 %v890, %v891
        %v893 = vrot.slane %v892, 1
        %v894 = vmax.f32 %v892, %v893
        %v895 = vsel %vm831, %v615, -inf
        %v896 = vsel %vm831, %v620, -inf
        %v897 = vmax.f32 %v895, %v896
        %v898 = vrot.slane %v897, 4
        %v899 = vmax.f32 %v897, %v898
        %v900 = vrot.slane %v899, 2
        %v901 = vmax.f32 %v899, %v900
        %v902 = vrot.slane %v901, 1
        %v903 = vmax.f32 %v901, %v902
        %v904 = vsub.f32 %v545, %v840
        %v905 = vsub.f32 %v550, %v840
        %v906 = vsub.f32 %v555, %v849
        %v907 = vsub.f32 %v560, %v849
        %v908 = vsub.f32 %v565, %v858
        %v909 = vsub.f32 %v570, %v858
        %v910 = vsub.f32 %v575, %v867
        %v911 = vsub.f32 %v580, %v867
        %v912 = vsub.f32 %v585, %v876
        %v913 = vsub.f32 %v590, %v876
        %v914 = vsub.f32 %v595, %v885
        %v915 = vsub.f32 %v600, %v885
        %v916 = vsub.f32 %v605, %v894
        %v917 = vsub.f32 %v610, %v894
        %v918 = vsub.f32 %v615, %v903
        %v919 = vsub.f32 %v620, %v903
        %v920 = vmul.f32 %v904, 1.442695
        %v921 = vpow.pop %v920
        %v922 = vmul.f32 %v905, 1.442695
        %v923 = vpow.pop %v922
        %v924 = vmul.f32 %v906, 1.442695
        %v925 = vpow.pop %v924
        %v926 = vmul.f32 %v907, 1.442695
        %v927 = vpow.pop %v926
        %v928 = vmul.f32 %v908, 1.442695
        %v929 = vpow.pop %v928
        %v930 = vmul.f32 %v909, 1.442695
        %v931 = vpow.pop %v930
        %v932 = vmul.f32 %v910, 1.442695
        %v933 = vpow.pop %v932
        %v934 = vmul.f32 %v911, 1.442695
        %v935 = vpow.pop %v934
        %v936 = vmul.f32 %v912, 1.442695
        %v937 = vpow.pop %v936
        %v938 = vmul.f32 %v913, 1.442695
        %v939 = vpow.pop %v938
        %v940 = vmul.f32 %v914, 1.442695
        %v941 = vpow.pop %v940
        %v942 = vmul.f32 %v915, 1.442695
        %v943 = vpow.pop %v942
        %v944 = vmul.f32 %v916, 1.442695
        %v945 = vpow.pop %v944
        %v946 = vmul.f32 %v917, 1.442695
        %v947 = vpow.pop %v946
        %v948 = vmul.f32 %v918, 1.442695
        %v949 = vpow.pop %v948
        %v950 = vmul.f32 %v919, 1.442695
        %v951 = vpow.pop %v950
        %v952 = vsel %vm831, %v921, 0.0
        %v953 = vsel %vm831, %v923, 0.0
        %v954 = vadd.f32 %v952, %v953
        %v955 = vrot.slane %v954, 4
        %v956 = vadd.f32 %v954, %v955
        %v957 = vrot.slane %v956, 2
        %v958 = vadd.f32 %v956, %v957
        %v959 = vrot.slane %v958, 1
        %v960 = vadd.f32 %v958, %v959
        %v961 = vsel %vm831, %v925, 0.0
        %v962 = vsel %vm831, %v927, 0.0
        %v963 = vadd.f32 %v961, %v962
        %v964 = vrot.slane %v963, 4
        %v965 = vadd.f32 %v963, %v964
        %v966 = vrot.slane %v965, 2
        %v967 = vadd.f32 %v965, %v966
        %v968 = vrot.slane %v967, 1
        %v969 = vadd.f32 %v967, %v968
        %v970 = vsel %vm831, %v929, 0.0
        %v971 = vsel %vm831, %v931, 0.0
        %v972 = vadd.f32 %v970, %v971
        %v973 = vrot.slane %v972, 4
        %v974 = vadd.f32 %v972, %v973
        %v975 = vrot.slane %v974, 2
        %v976 = vadd.f32 %v974, %v975
        %v977 = vrot.slane %v976, 1
        %v978 = vadd.f32 %v976, %v977
        %v979 = vsel %vm831, %v933, 0.0
        %v980 = vsel %vm831, %v935, 0.0
        %v981 = vadd.f32 %v979, %v980
        %v982 = vrot.slane %v981, 4
        %v983 = vadd.f32 %v981, %v982
        %v984 = vrot.slane %v983, 2
        %v985 = vadd.f32 %v983, %v984
        %v986 = vrot.slane %v985, 1
        %v987 = vadd.f32 %v985, %v986
        %v988 = vsel %vm831, %v937, 0.0
        %v989 = vsel %vm831, %v939, 0.0
        %v990 = vadd.f32 %v988, %v989
        %v991 = vrot.slane %v990, 4
        %v992 = vadd.f32 %v990, %v991
        %v993 = vrot.slane %v992, 2
        %v994 = vadd.f32 %v992, %v993
        %v995 = vrot.slane %v994, 1
        %v996 = vadd.f32 %v994, %v995
        %v997 = vsel %vm831, %v941, 0.0
        %v998 = vsel %vm831, %v943, 0.0
        %v999 = vadd.f32 %v997, %v998
        %v1000 = vrot.slane %v999, 4
        %v1001 = vadd.f32 %v999, %v1000
        %v1002 = vrot.slane %v1001, 2
        %v1003 = vadd.f32 %v1001, %v1002
        %v1004 = vrot.slane %v1003, 1
        %v1005 = vadd.f32 %v1003, %v1004
        %v1006 = vsel %vm831, %v945, 0.0
        %v1007 = vsel %vm831, %v947, 0.0
        %v1008 = vadd.f32 %v1006, %v1007
        %v1009 = vrot.slane %v1008, 4
        %v1010 = vadd.f32 %v1008, %v1009
        %v1011 = vrot.slane %v1010, 2
        %v1012 = vadd.f32 %v1010, %v1011
        %v1013 = vrot.slane %v1012, 1
        %v1014 = vadd.f32 %v1012, %v1013
        %v1015 = vsel %vm831, %v949, 0.0
        %v1016 = vsel %vm831, %v951, 0.0
        %v1017 = vadd.f32 %v1015, %v1016
        %v1018 = vrot.slane %v1017, 4
        %v1019 = vadd.f32 %v1017, %v1018
        %v1020 = vrot.slane %v1019, 2
        %v1021 = vadd.f32 %v1019, %v1020
        %v1022 = vrot.slane %v1021, 1
        %v1023 = vadd.f32 %v1021, %v1022
        %v1024 = vrcp.pop %v960
        %v1025 = vrcp.pop %v969
        %v1026 = vrcp.pop %v978
        %v1027 = vrcp.pop %v987
        %v1028 = vrcp.pop %v996
        %v1029 = vrcp.pop %v1005
        %v1030 = vrcp.pop %v1014
        %v1031 = vrcp.pop %v1023
        %v1032 = vmul.f32 %v921, %v1024
        %v1033 = vmul.f32 %v923, %v1024
        %v1034 = vmul.f32 %v925, %v1025
        %v1035 = vmul.f32 %v927, %v1025
        %v1036 = vmul.f32 %v929, %v1026
        %v1037 = vmul.f32 %v931, %v1026
        %v1038 = vmul.f32 %v933, %v1027
        %v1039 = vmul.f32 %v935, %v1027
        %v1040 = vmul.f32 %v937, %v1028
        %v1041 = vmul.f32 %v939, %v1028
        %v1042 = vmul.f32 %v941, %v1029
        %v1043 = vmul.f32 %v943, %v1029
        %v1044 = vmul.f32 %v945, %v1030
        %v1045 = vmul.f32 %v947, %v1030
        %v1046 = vmul.f32 %v949, %v1031
        %v1047 = vmul.f32 %v951, %v1031
        %1048 = vxpose.xlu0.b32.start [1/16] %v1032, 128
        %1049 = vxpose.xlu0.b32.cont [2/16] %v1033, 128
        %1050 = vxpose.xlu0.b32.cont [3/16] 0.0, 128
        %1051 = vxpose.xlu0.b32.cont [4/16] 0.0, 128
        %1052 = vxpose.xlu0.b32.cont [5/16] 0.0, 128
        %1053 = vxpose.xlu0.b32.cont [6/16] 0.0, 128
        %1054 = vxpose.xlu0.b32.cont [7/16] 0.0, 128
        %1055 = vxpose.xlu0.b32.cont [8/16] 0.0, 128
        %1056 = vxpose.xlu0.b32.cont [9/16] 0.0, 128
        %1057 = vxpose.xlu0.b32.cont [10/16] 0.0, 128
        %1058 = vxpose.xlu0.b32.cont [11/16] 0.0, 128
        %1059 = vxpose.xlu0.b32.cont [12/16] 0.0, 128
        %1060 = vxpose.xlu0.b32.cont [13/16] 0.0, 128
        %1061 = vxpose.xlu0.b32.cont [14/16] 0.0, 128
        %1062 = vxpose.xlu0.b32.cont [15/16] 0.0, 128
        %1063 = vxpose.xlu0.b32.end [16/16] 0.0, 128
        %v1064 = vpop.trf.xlu0
        %v1065 = vpop.trf.xlu0
        %v1066 = vpop.trf.xlu0
        %v1067 = vpop.trf.xlu0
        %v1068 = vpop.trf.xlu0
        %v1069 = vpop.trf.xlu0
        %v1070 = vpop.trf.xlu0
        %v1071 = vpop.trf.xlu0
        %v1072 = vpop.trf.xlu0
        %v1073 = vpop.trf.xlu0
        %v1074 = vpop.trf.xlu0
        %v1075 = vpop.trf.xlu0
        %v1076 = vpop.trf.xlu0
        %v1077 = vpop.trf.xlu0
        %v1078 = vpop.trf.xlu0
        %v1079 = vpop.trf.xlu0
        %vm1080 = vcmask 130048
        %v1082 = vsel %vm1080, %v1064, 0
        %1084 = vmatprep.subr.mxu0 0.0
        %1085 = vmatpush1.msra.mxu0 %v753
        %1086 = vmatprep.subr.mxu0 0.0
        %1087 = vmatpush1.msra.mxu0 %v758
        %1088 = vmatprep.subr.mxu0 0.0
        %1089 = vmatpush1.msra.mxu0 0.0
        %1090 = vmatprep.subr.mxu0 0.0
        %1091 = vmatpush1.msra.mxu0 0.0
        %1092 = vmatprep.subr.mxu0 0.0
        %1093 = vmatpush1.msra.mxu0 0.0
        %1094 = vmatprep.subr.mxu0 0.0
        %1095 = vmatpush1.msra.mxu0 0.0
        %1096 = vmatprep.subr.mxu0 0.0
        %1097 = vmatpush1.msra.mxu0 0.0
        %1098 = vmatprep.subr.mxu0 0.0
        %1099 = vmatpush1.msra.mxu0 0.0
        %1100 = vmatprep.subr.mxu0 0.0
        %1101 = vmatpush1.msra.mxu0 0.0
        %1102 = vmatprep.subr.mxu0 0.0
        %1103 = vmatpush1.msra.mxu0 0.0
        %1104 = vmatprep.subr.mxu0 0.0
        %1105 = vmatpush1.msra.mxu0 0.0
        %1106 = vmatprep.subr.mxu0 0.0
        %1107 = vmatpush1.msra.mxu0 0.0
        %1108 = vmatprep.subr.mxu0 0.0
        %1109 = vmatpush1.msra.mxu0 0.0
        %1110 = vmatprep.subr.mxu0 0.0
        %1111 = vmatpush1.msra.mxu0 0.0
        %1112 = vmatprep.subr.mxu0 0.0
        %1113 = vmatpush1.msra.mxu0 0.0
        %1114 = vmatprep.subr.mxu0 0.0
        %1115 = vmatpush1.msra.mxu0 0.0
        %1116 = vmatprep.subr.mxu0 0.0
        %1117 = vmatpush1.msra.mxu0 0.0
        %1118 = vmatprep.subr.mxu0 0.0
        %1119 = vmatpush1.msra.mxu0 0.0
        %1120 = vmatprep.subr.mxu0 0.0
        %1121 = vmatpush1.msra.mxu0 0.0
        %1122 = vmatprep.subr.mxu0 0.0
        %1123 = vmatpush1.msra.mxu0 0.0
        %1124 = vmatprep.subr.mxu0 0.0
        %1125 = vmatpush1.msra.mxu0 0.0
        %1126 = vmatprep.subr.mxu0 0.0
        %1127 = vmatpush1.msra.mxu0 0.0
        %1128 = vmatprep.subr.mxu0 0.0
        %1129 = vmatpush1.msra.mxu0 0.0
        %1130 = vmatprep.subr.mxu0 0.0
        %1131 = vmatpush1.msra.mxu0 0.0
        %1132 = vmatprep.subr.mxu0 0.0
        %1133 = vmatpush1.msra.mxu0 0.0
        %1134 = vmatprep.subr.mxu0 0.0
        %1135 = vmatpush1.msra.mxu0 0.0
        %1136 = vmatprep.subr.mxu0 0.0
        %1137 = vmatpush1.msra.mxu0 0.0
        %1138 = vmatprep.subr.mxu0 0.0
        %1139 = vmatpush1.msra.mxu0 0.0
        %1140 = vmatprep.subr.mxu0 0.0
        %1141 = vmatpush1.msra.mxu0 0.0
        %1142 = vmatprep.subr.mxu0 0.0
        %1143 = vmatpush1.msra.mxu0 0.0
        %1144 = vmatprep.subr.mxu0 0.0
        %1145 = vmatpush1.msra.mxu0 0.0
        %1146 = vmatprep.subr.mxu0 0.0
        %1147 = vmatpush1.msra.mxu0 0.0
        %1148 = vmatprep.mubr.f32.mxu0 0.0
        %1149 = vmatmul.mubr.f32.gmra.mrb[0].mxu0 %v1082
        %v1150 = vpop.f32.mrb[0].mxu0
        %v1151 = vadd.f32 0.0, %v1150
        %v1152 = vpop.f32.mrb[0].mxu0
        %1153 = vdwg.mxu0
        %1154 = vxpose.xlu0.b32.start [1/16] %v1034, 128
        %1155 = vxpose.xlu0.b32.cont [2/16] %v1035, 128
        %1156 = vxpose.xlu0.b32.cont [3/16] 0.0, 128
        %1157 = vxpose.xlu0.b32.cont [4/16] 0.0, 128
        %1158 = vxpose.xlu0.b32.cont [5/16] 0.0, 128
        %1159 = vxpose.xlu0.b32.cont [6/16] 0.0, 128
        %1160 = vxpose.xlu0.b32.cont [7/16] 0.0, 128
        %1161 = vxpose.xlu0.b32.cont [8/16] 0.0, 128
        %1162 = vxpose.xlu0.b32.cont [9/16] 0.0, 128
        %1163 = vxpose.xlu0.b32.cont [10/16] 0.0, 128
        %1164 = vxpose.xlu0.b32.cont [11/16] 0.0, 128
        %1165 = vxpose.xlu0.b32.cont [12/16] 0.0, 128
        %1166 = vxpose.xlu0.b32.cont [13/16] 0.0, 128
        %1167 = vxpose.xlu0.b32.cont [14/16] 0.0, 128
        %1168 = vxpose.xlu0.b32.cont [15/16] 0.0, 128
        %1169 = vxpose.xlu0.b32.end [16/16] 0.0, 128
        %v1170 = vpop.trf.xlu0
        %v1171 = vpop.trf.xlu0
        %v1172 = vpop.trf.xlu0
        %v1173 = vpop.trf.xlu0
        %v1174 = vpop.trf.xlu0
        %v1175 = vpop.trf.xlu0
        %v1176 = vpop.trf.xlu0
        %v1177 = vpop.trf.xlu0
        %v1178 = vpop.trf.xlu0
        %v1179 = vpop.trf.xlu0
        %v1180 = vpop.trf.xlu0
        %v1181 = vpop.trf.xlu0
        %v1182 = vpop.trf.xlu0
        %v1183 = vpop.trf.xlu0
        %v1184 = vpop.trf.xlu0
        %v1185 = vpop.trf.xlu0
        %v1187 = vsel %vm1080, %v1170, 0
        %1189 = vmatprep.subr.mxu0 0.0
        %1190 = vmatpush1.msra.mxu0 %v763
        %1191 = vmatprep.subr.mxu0 0.0
        %1192 = vmatpush1.msra.mxu0 %v768
        %1193 = vmatprep.subr.mxu0 0.0
        %1194 = vmatpush1.msra.mxu0 0.0
        %1195 = vmatprep.subr.mxu0 0.0
        %1196 = vmatpush1.msra.mxu0 0.0
        %1197 = vmatprep.subr.mxu0 0.0
        %1198 = vmatpush1.msra.mxu0 0.0
        %1199 = vmatprep.subr.mxu0 0.0
        %1200 = vmatpush1.msra.mxu0 0.0
        %1201 = vmatprep.subr.mxu0 0.0
        %1202 = vmatpush1.msra.mxu0 0.0
        %1203 = vmatprep.subr.mxu0 0.0
        %1204 = vmatpush1.msra.mxu0 0.0
        %1205 = vmatprep.subr.mxu0 0.0
        %1206 = vmatpush1.msra.mxu0 0.0
        %1207 = vmatprep.subr.mxu0 0.0
        %1208 = vmatpush1.msra.mxu0 0.0
        %1209 = vmatprep.subr.mxu0 0.0
        %1210 = vmatpush1.msra.mxu0 0.0
        %1211 = vmatprep.subr.mxu0 0.0
        %1212 = vmatpush1.msra.mxu0 0.0
        %1213 = vmatprep.subr.mxu0 0.0
        %1214 = vmatpush1.msra.mxu0 0.0
        %1215 = vmatprep.subr.mxu0 0.0
        %1216 = vmatpush1.msra.mxu0 0.0
        %1217 = vmatprep.subr.mxu0 0.0
        %1218 = vmatpush1.msra.mxu0 0.0
        %1219 = vmatprep.subr.mxu0 0.0
        %1220 = vmatpush1.msra.mxu0 0.0
        %1221 = vmatprep.subr.mxu0 0.0
        %1222 = vmatpush1.msra.mxu0 0.0
        %1223 = vmatprep.subr.mxu0 0.0
        %1224 = vmatpush1.msra.mxu0 0.0
        %1225 = vmatprep.subr.mxu0 0.0
        %1226 = vmatpush1.msra.mxu0 0.0
        %1227 = vmatprep.subr.mxu0 0.0
        %1228 = vmatpush1.msra.mxu0 0.0
        %1229 = vmatprep.subr.mxu0 0.0
        %1230 = vmatpush1.msra.mxu0 0.0
        %1231 = vmatprep.subr.mxu0 0.0
        %1232 = vmatpush1.msra.mxu0 0.0
        %1233 = vmatprep.subr.mxu0 0.0
        %1234 = vmatpush1.msra.mxu0 0.0
        %1235 = vmatprep.subr.mxu0 0.0
        %1236 = vmatpush1.msra.mxu0 0.0
        %1237 = vmatprep.subr.mxu0 0.0
        %1238 = vmatpush1.msra.mxu0 0.0
        %1239 = vmatprep.subr.mxu0 0.0
        %1240 = vmatpush1.msra.mxu0 0.0
        %1241 = vmatprep.subr.mxu0 0.0
        %1242 = vmatpush1.msra.mxu0 0.0
        %1243 = vmatprep.subr.mxu0 0.0
        %1244 = vmatpush1.msra.mxu0 0.0
        %1245 = vmatprep.subr.mxu0 0.0
        %1246 = vmatpush1.msra.mxu0 0.0
        %1247 = vmatprep.subr.mxu0 0.0
        %1248 = vmatpush1.msra.mxu0 0.0
        %1249 = vmatprep.subr.mxu0 0.0
        %1250 = vmatpush1.msra.mxu0 0.0
        %1251 = vmatprep.subr.mxu0 0.0
        %1252 = vmatpush1.msra.mxu0 0.0
        %1253 = vmatprep.mubr.f32.mxu0 0.0
        %1254 = vmatmul.mubr.f32.gmra.mrb[0].mxu0 %v1187
        %v1255 = vpop.f32.mrb[0].mxu0
        %v1256 = vadd.f32 0.0, %v1255
        %v1257 = vpop.f32.mrb[0].mxu0
        %1258 = vdwg.mxu0
        %1259 = vxpose.xlu0.b32.start [1/16] %v1036, 128
        %1260 = vxpose.xlu0.b32.cont [2/16] %v1037, 128
        %1261 = vxpose.xlu0.b32.cont [3/16] 0.0, 128
        %1262 = vxpose.xlu0.b32.cont [4/16] 0.0, 128
        %1263 = vxpose.xlu0.b32.cont [5/16] 0.0, 128
        %1264 = vxpose.xlu0.b32.cont [6/16] 0.0, 128
        %1265 = vxpose.xlu0.b32.cont [7/16] 0.0, 128
        %1266 = vxpose.xlu0.b32.cont [8/16] 0.0, 128
        %1267 = vxpose.xlu0.b32.cont [9/16] 0.0, 128
        %1268 = vxpose.xlu0.b32.cont [10/16] 0.0, 128
        %1269 = vxpose.xlu0.b32.cont [11/16] 0.0, 128
        %1270 = vxpose.xlu0.b32.cont [12/16] 0.0, 128
        %1271 = vxpose.xlu0.b32.cont [13/16] 0.0, 128
        %1272 = vxpose.xlu0.b32.cont [14/16] 0.0, 128
        %1273 = vxpose.xlu0.b32.cont [15/16] 0.0, 128
        %1274 = vxpose.xlu0.b32.end [16/16] 0.0, 128
        %v1275 = vpop.trf.xlu0
        %v1276 = vpop.trf.xlu0
        %v1277 = vpop.trf.xlu0
        %v1278 = vpop.trf.xlu0
        %v1279 = vpop.trf.xlu0
        %v1280 = vpop.trf.xlu0
        %v1281 = vpop.trf.xlu0
        %v1282 = vpop.trf.xlu0
        %v1283 = vpop.trf.xlu0
        %v1284 = vpop.trf.xlu0
        %v1285 = vpop.trf.xlu0
        %v1286 = vpop.trf.xlu0
        %v1287 = vpop.trf.xlu0
        %v1288 = vpop.trf.xlu0
        %v1289 = vpop.trf.xlu0
        %v1290 = vpop.trf.xlu0
        %v1292 = vsel %vm1080, %v1275, 0
        %1294 = vmatprep.subr.mxu0 0.0
        %1295 = vmatpush1.msra.mxu0 %v773
        %1296 = vmatprep.subr.mxu0 0.0
        %1297 = vmatpush1.msra.mxu0 %v778
        %1298 = vmatprep.subr.mxu0 0.0
        %1299 = vmatpush1.msra.mxu0 0.0
        %1300 = vmatprep.subr.mxu0 0.0
        %1301 = vmatpush1.msra.mxu0 0.0
        %1302 = vmatprep.subr.mxu0 0.0
        %1303 = vmatpush1.msra.mxu0 0.0
        %1304 = vmatprep.subr.mxu0 0.0
        %1305 = vmatpush1.msra.mxu0 0.0
        %1306 = vmatprep.subr.mxu0 0.0
        %1307 = vmatpush1.msra.mxu0 0.0
        %1308 = vmatprep.subr.mxu0 0.0
        %1309 = vmatpush1.msra.mxu0 0.0
        %1310 = vmatprep.subr.mxu0 0.0
        %1311 = vmatpush1.msra.mxu0 0.0
        %1312 = vmatprep.subr.mxu0 0.0
        %1313 = vmatpush1.msra.mxu0 0.0
        %1314 = vmatprep.subr.mxu0 0.0
        %1315 = vmatpush1.msra.mxu0 0.0
        %1316 = vmatprep.subr.mxu0 0.0
        %1317 = vmatpush1.msra.mxu0 0.0
        %1318 = vmatprep.subr.mxu0 0.0
        %1319 = vmatpush1.msra.mxu0 0.0
        %1320 = vmatprep.subr.mxu0 0.0
        %1321 = vmatpush1.msra.mxu0 0.0
        %1322 = vmatprep.subr.mxu0 0.0
        %1323 = vmatpush1.msra.mxu0 0.0
        %1324 = vmatprep.subr.mxu0 0.0
        %1325 = vmatpush1.msra.mxu0 0.0
        %1326 = vmatprep.subr.mxu0 0.0
        %1327 = vmatpush1.msra.mxu0 0.0
        %1328 = vmatprep.subr.mxu0 0.0
        %1329 = vmatpush1.msra.mxu0 0.0
        %1330 = vmatprep.subr.mxu0 0.0
        %1331 = vmatpush1.msra.mxu0 0.0
        %1332 = vmatprep.subr.mxu0 0.0
        %1333 = vmatpush1.msra.mxu0 0.0
        %1334 = vmatprep.subr.mxu0 0.0
        %1335 = vmatpush1.msra.mxu0 0.0
        %1336 = vmatprep.subr.mxu0 0.0
        %1337 = vmatpush1.msra.mxu0 0.0
        %1338 = vmatprep.subr.mxu0 0.0
        %1339 = vmatpush1.msra.mxu0 0.0
        %1340 = vmatprep.subr.mxu0 0.0
        %1341 = vmatpush1.msra.mxu0 0.0
        %1342 = vmatprep.subr.mxu0 0.0
        %1343 = vmatpush1.msra.mxu0 0.0
        %1344 = vmatprep.subr.mxu0 0.0
        %1345 = vmatpush1.msra.mxu0 0.0
        %1346 = vmatprep.subr.mxu0 0.0
        %1347 = vmatpush1.msra.mxu0 0.0
        %1348 = vmatprep.subr.mxu0 0.0
        %1349 = vmatpush1.msra.mxu0 0.0
        %1350 = vmatprep.subr.mxu0 0.0
        %1351 = vmatpush1.msra.mxu0 0.0
        %1352 = vmatprep.subr.mxu0 0.0
        %1353 = vmatpush1.msra.mxu0 0.0
        %1354 = vmatprep.subr.mxu0 0.0
        %1355 = vmatpush1.msra.mxu0 0.0
        %1356 = vmatprep.subr.mxu0 0.0
        %1357 = vmatpush1.msra.mxu0 0.0
        %1358 = vmatprep.mubr.f32.mxu0 0.0
        %1359 = vmatmul.mubr.f32.gmra.mrb[0].mxu0 %v1292
        %v1360 = vpop.f32.mrb[0].mxu0
        %v1361 = vadd.f32 0.0, %v1360
        %v1362 = vpop.f32.mrb[0].mxu0
        %1363 = vdwg.mxu0
        %1364 = vxpose.xlu0.b32.start [1/16] %v1038, 128
        %1365 = vxpose.xlu0.b32.cont [2/16] %v1039, 128
        %1366 = vxpose.xlu0.b32.cont [3/16] 0.0, 128
        %1367 = vxpose.xlu0.b32.cont [4/16] 0.0, 128
        %1368 = vxpose.xlu0.b32.cont [5/16] 0.0, 128
        %1369 = vxpose.xlu0.b32.cont [6/16] 0.0, 128
        %1370 = vxpose.xlu0.b32.cont [7/16] 0.0, 128
        %1371 = vxpose.xlu0.b32.cont [8/16] 0.0, 128
        %1372 = vxpose.xlu0.b32.cont [9/16] 0.0, 128
        %1373 = vxpose.xlu0.b32.cont [10/16] 0.0, 128
        %1374 = vxpose.xlu0.b32.cont [11/16] 0.0, 128
        %1375 = vxpose.xlu0.b32.cont [12/16] 0.0, 128
        %1376 = vxpose.xlu0.b32.cont [13/16] 0.0, 128
        %1377 = vxpose.xlu0.b32.cont [14/16] 0.0, 128
        %1378 = vxpose.xlu0.b32.cont [15/16] 0.0, 128
        %1379 = vxpose.xlu0.b32.end [16/16] 0.0, 128
        %v1380 = vpop.trf.xlu0
        %v1381 = vpop.trf.xlu0
        %v1382 = vpop.trf.xlu0
        %v1383 = vpop.trf.xlu0
        %v1384 = vpop.trf.xlu0
        %v1385 = vpop.trf.xlu0
        %v1386 = vpop.trf.xlu0
        %v1387 = vpop.trf.xlu0
        %v1388 = vpop.trf.xlu0
        %v1389 = vpop.trf.xlu0
        %v1390 = vpop.trf.xlu0
        %v1391 = vpop.trf.xlu0
        %v1392 = vpop.trf.xlu0
        %v1393 = vpop.trf.xlu0
        %v1394 = vpop.trf.xlu0
        %v1395 = vpop.trf.xlu0
        %v1397 = vsel %vm1080, %v1380, 0
        %1399 = vmatprep.subr.mxu0 0.0
        %1400 = vmatpush1.msra.mxu0 %v783
        %1401 = vmatprep.subr.mxu0 0.0
        %1402 = vmatpush1.msra.mxu0 %v788
        %1403 = vmatprep.subr.mxu0 0.0
        %1404 = vmatpush1.msra.mxu0 0.0
        %1405 = vmatprep.subr.mxu0 0.0
        %1406 = vmatpush1.msra.mxu0 0.0
        %1407 = vmatprep.subr.mxu0 0.0
        %1408 = vmatpush1.msra.mxu0 0.0
        %1409 = vmatprep.subr.mxu0 0.0
        %1410 = vmatpush1.msra.mxu0 0.0
        %1411 = vmatprep.subr.mxu0 0.0
        %1412 = vmatpush1.msra.mxu0 0.0
        %1413 = vmatprep.subr.mxu0 0.0
        %1414 = vmatpush1.msra.mxu0 0.0
        %1415 = vmatprep.subr.mxu0 0.0
        %1416 = vmatpush1.msra.mxu0 0.0
        %1417 = vmatprep.subr.mxu0 0.0
        %1418 = vmatpush1.msra.mxu0 0.0
        %1419 = vmatprep.subr.mxu0 0.0
        %1420 = vmatpush1.msra.mxu0 0.0
        %1421 = vmatprep.subr.mxu0 0.0
        %1422 = vmatpush1.msra.mxu0 0.0
        %1423 = vmatprep.subr.mxu0 0.0
        %1424 = vmatpush1.msra.mxu0 0.0
        %1425 = vmatprep.subr.mxu0 0.0
        %1426 = vmatpush1.msra.mxu0 0.0
        %1427 = vmatprep.subr.mxu0 0.0
        %1428 = vmatpush1.msra.mxu0 0.0
        %1429 = vmatprep.subr.mxu0 0.0
        %1430 = vmatpush1.msra.mxu0 0.0
        %1431 = vmatprep.subr.mxu0 0.0
        %1432 = vmatpush1.msra.mxu0 0.0
        %1433 = vmatprep.subr.mxu0 0.0
        %1434 = vmatpush1.msra.mxu0 0.0
        %1435 = vmatprep.subr.mxu0 0.0
        %1436 = vmatpush1.msra.mxu0 0.0
        %1437 = vmatprep.subr.mxu0 0.0
        %1438 = vmatpush1.msra.mxu0 0.0
        %1439 = vmatprep.subr.mxu0 0.0
        %1440 = vmatpush1.msra.mxu0 0.0
        %1441 = vmatprep.subr.mxu0 0.0
        %1442 = vmatpush1.msra.mxu0 0.0
        %1443 = vmatprep.subr.mxu0 0.0
        %1444 = vmatpush1.msra.mxu0 0.0
        %1445 = vmatprep.subr.mxu0 0.0
        %1446 = vmatpush1.msra.mxu0 0.0
        %1447 = vmatprep.subr.mxu0 0.0
        %1448 = vmatpush1.msra.mxu0 0.0
        %1449 = vmatprep.subr.mxu0 0.0
        %1450 = vmatpush1.msra.mxu0 0.0
        %1451 = vmatprep.subr.mxu0 0.0
        %1452 = vmatpush1.msra.mxu0 0.0
        %1453 = vmatprep.subr.mxu0 0.0
        %1454 = vmatpush1.msra.mxu0 0.0
        %1455 = vmatprep.subr.mxu0 0.0
        %1456 = vmatpush1.msra.mxu0 0.0
        %1457 = vmatprep.subr.mxu0 0.0
        %1458 = vmatpush1.msra.mxu0 0.0
        %1459 = vmatprep.subr.mxu0 0.0
        %1460 = vmatpush1.msra.mxu0 0.0
        %1461 = vmatprep.subr.mxu0 0.0
        %1462 = vmatpush1.msra.mxu0 0.0
        %1463 = vmatprep.mubr.f32.mxu0 0.0
        %1464 = vmatmul.mubr.f32.gmra.mrb[0].mxu0 %v1397
        %v1465 = vpop.f32.mrb[0].mxu0
        %v1466 = vadd.f32 0.0, %v1465
        %v1467 = vpop.f32.mrb[0].mxu0
        %1468 = vdwg.mxu0
        %1469 = vxpose.xlu0.b32.start [1/16] %v1040, 128
        %1470 = vxpose.xlu0.b32.cont [2/16] %v1041, 128
        %1471 = vxpose.xlu0.b32.cont [3/16] 0.0, 128
        %1472 = vxpose.xlu0.b32.cont [4/16] 0.0, 128
        %1473 = vxpose.xlu0.b32.cont [5/16] 0.0, 128
        %1474 = vxpose.xlu0.b32.cont [6/16] 0.0, 128
        %1475 = vxpose.xlu0.b32.cont [7/16] 0.0, 128
        %1476 = vxpose.xlu0.b32.cont [8/16] 0.0, 128
        %1477 = vxpose.xlu0.b32.cont [9/16] 0.0, 128
        %1478 = vxpose.xlu0.b32.cont [10/16] 0.0, 128
        %1479 = vxpose.xlu0.b32.cont [11/16] 0.0, 128
        %1480 = vxpose.xlu0.b32.cont [12/16] 0.0, 128
        %1481 = vxpose.xlu0.b32.cont [13/16] 0.0, 128
        %1482 = vxpose.xlu0.b32.cont [14/16] 0.0, 128
        %1483 = vxpose.xlu0.b32.cont [15/16] 0.0, 128
        %1484 = vxpose.xlu0.b32.end [16/16] 0.0, 128
        %v1485 = vpop.trf.xlu0
        %v1486 = vpop.trf.xlu0
        %v1487 = vpop.trf.xlu0
        %v1488 = vpop.trf.xlu0
        %v1489 = vpop.trf.xlu0
        %v1490 = vpop.trf.xlu0
        %v1491 = vpop.trf.xlu0
        %v1492 = vpop.trf.xlu0
        %v1493 = vpop.trf.xlu0
        %v1494 = vpop.trf.xlu0
        %v1495 = vpop.trf.xlu0
        %v1496 = vpop.trf.xlu0
        %v1497 = vpop.trf.xlu0
        %v1498 = vpop.trf.xlu0
        %v1499 = vpop.trf.xlu0
        %v1500 = vpop.trf.xlu0
        %v1502 = vsel %vm1080, %v1485, 0
        %1504 = vmatprep.subr.mxu0 0.0
        %1505 = vmatpush1.msra.mxu0 %v793
        %1506 = vmatprep.subr.mxu0 0.0
        %1507 = vmatpush1.msra.mxu0 %v798
        %1508 = vmatprep.subr.mxu0 0.0
        %1509 = vmatpush1.msra.mxu0 0.0
        %1510 = vmatprep.subr.mxu0 0.0
        %1511 = vmatpush1.msra.mxu0 0.0
        %1512 = vmatprep.subr.mxu0 0.0
        %1513 = vmatpush1.msra.mxu0 0.0
        %1514 = vmatprep.subr.mxu0 0.0
        %1515 = vmatpush1.msra.mxu0 0.0
        %1516 = vmatprep.subr.mxu0 0.0
        %1517 = vmatpush1.msra.mxu0 0.0
        %1518 = vmatprep.subr.mxu0 0.0
        %1519 = vmatpush1.msra.mxu0 0.0
        %1520 = vmatprep.subr.mxu0 0.0
        %1521 = vmatpush1.msra.mxu0 0.0
        %1522 = vmatprep.subr.mxu0 0.0
        %1523 = vmatpush1.msra.mxu0 0.0
        %1524 = vmatprep.subr.mxu0 0.0
        %1525 = vmatpush1.msra.mxu0 0.0
        %1526 = vmatprep.subr.mxu0 0.0
        %1527 = vmatpush1.msra.mxu0 0.0
        %1528 = vmatprep.subr.mxu0 0.0
        %1529 = vmatpush1.msra.mxu0 0.0
        %1530 = vmatprep.subr.mxu0 0.0
        %1531 = vmatpush1.msra.mxu0 0.0
        %1532 = vmatprep.subr.mxu0 0.0
        %1533 = vmatpush1.msra.mxu0 0.0
        %1534 = vmatprep.subr.mxu0 0.0
        %1535 = vmatpush1.msra.mxu0 0.0
        %1536 = vmatprep.subr.mxu0 0.0
        %1537 = vmatpush1.msra.mxu0 0.0
        %1538 = vmatprep.subr.mxu0 0.0
        %1539 = vmatpush1.msra.mxu0 0.0
        %1540 = vmatprep.subr.mxu0 0.0
        %1541 = vmatpush1.msra.mxu0 0.0
        %1542 = vmatprep.subr.mxu0 0.0
        %1543 = vmatpush1.msra.mxu0 0.0
        %1544 = vmatprep.subr.mxu0 0.0
        %1545 = vmatpush1.msra.mxu0 0.0
        %1546 = vmatprep.subr.mxu0 0.0
        %1547 = vmatpush1.msra.mxu0 0.0
        %1548 = vmatprep.subr.mxu0 0.0
        %1549 = vmatpush1.msra.mxu0 0.0
        %1550 = vmatprep.subr.mxu0 0.0
        %1551 = vmatpush1.msra.mxu0 0.0
        %1552 = vmatprep.subr.mxu0 0.0
        %1553 = vmatpush1.msra.mxu0 0.0
        %1554 = vmatprep.subr.mxu0 0.0
        %1555 = vmatpush1.msra.mxu0 0.0
        %1556 = vmatprep.subr.mxu0 0.0
        %1557 = vmatpush1.msra.mxu0 0.0
        %1558 = vmatprep.subr.mxu0 0.0
        %1559 = vmatpush1.msra.mxu0 0.0
        %1560 = vmatprep.subr.mxu0 0.0
        %1561 = vmatpush1.msra.mxu0 0.0
        %1562 = vmatprep.subr.mxu0 0.0
        %1563 = vmatpush1.msra.mxu0 0.0
        %1564 = vmatprep.subr.mxu0 0.0
        %1565 = vmatpush1.msra.mxu0 0.0
        %1566 = vmatprep.subr.mxu0 0.0
        %1567 = vmatpush1.msra.mxu0 0.0
        %1568 = vmatprep.mubr.f32.mxu0 0.0
        %1569 = vmatmul.mubr.f32.gmra.mrb[0].mxu0 %v1502
        %v1570 = vpop.f32.mrb[0].mxu0
        %v1571 = vadd.f32 0.0, %v1570
        %v1572 = vpop.f32.mrb[0].mxu0
        %1573 = vdwg.mxu0
        %1574 = vxpose.xlu0.b32.start [1/16] %v1042, 128
        %1575 = vxpose.xlu0.b32.cont [2/16] %v1043, 128
        %1576 = vxpose.xlu0.b32.cont [3/16] 0.0, 128
        %1577 = vxpose.xlu0.b32.cont [4/16] 0.0, 128
        %1578 = vxpose.xlu0.b32.cont [5/16] 0.0, 128
        %1579 = vxpose.xlu0.b32.cont [6/16] 0.0, 128
        %1580 = vxpose.xlu0.b32.cont [7/16] 0.0, 128
        %1581 = vxpose.xlu0.b32.cont [8/16] 0.0, 128
        %1582 = vxpose.xlu0.b32.cont [9/16] 0.0, 128
        %1583 = vxpose.xlu0.b32.cont [10/16] 0.0, 128
        %1584 = vxpose.xlu0.b32.cont [11/16] 0.0, 128
        %1585 = vxpose.xlu0.b32.cont [12/16] 0.0, 128
        %1586 = vxpose.xlu0.b32.cont [13/16] 0.0, 128
        %1587 = vxpose.xlu0.b32.cont [14/16] 0.0, 128
        %1588 = vxpose.xlu0.b32.cont [15/16] 0.0, 128
        %1589 = vxpose.xlu0.b32.end [16/16] 0.0, 128
        %v1590 = vpop.trf.xlu0
        %v1591 = vpop.trf.xlu0
        %v1592 = vpop.trf.xlu0
        %v1593 = vpop.trf.xlu0
        %v1594 = vpop.trf.xlu0
        %v1595 = vpop.trf.xlu0
        %v1596 = vpop.trf.xlu0
        %v1597 = vpop.trf.xlu0
        %v1598 = vpop.trf.xlu0
        %v1599 = vpop.trf.xlu0
        %v1600 = vpop.trf.xlu0
        %v1601 = vpop.trf.xlu0
        %v1602 = vpop.trf.xlu0
        %v1603 = vpop.trf.xlu0
        %v1604 = vpop.trf.xlu0
        %v1605 = vpop.trf.xlu0
        %v1607 = vsel %vm1080, %v1590, 0
        %1609 = vmatprep.subr.mxu0 0.0
        %1610 = vmatpush1.msra.mxu0 %v803
        %1611 = vmatprep.subr.mxu0 0.0
        %1612 = vmatpush1.msra.mxu0 %v808
        %1613 = vmatprep.subr.mxu0 0.0
        %1614 = vmatpush1.msra.mxu0 0.0
        %1615 = vmatprep.subr.mxu0 0.0
        %1616 = vmatpush1.msra.mxu0 0.0
        %1617 = vmatprep.subr.mxu0 0.0
        %1618 = vmatpush1.msra.mxu0 0.0
        %1619 = vmatprep.subr.mxu0 0.0
        %1620 = vmatpush1.msra.mxu0 0.0
        %1621 = vmatprep.subr.mxu0 0.0
        %1622 = vmatpush1.msra.mxu0 0.0
        %1623 = vmatprep.subr.mxu0 0.0
        %1624 = vmatpush1.msra.mxu0 0.0
        %1625 = vmatprep.subr.mxu0 0.0
        %1626 = vmatpush1.msra.mxu0 0.0
        %1627 = vmatprep.subr.mxu0 0.0
        %1628 = vmatpush1.msra.mxu0 0.0
        %1629 = vmatprep.subr.mxu0 0.0
        %1630 = vmatpush1.msra.mxu0 0.0
        %1631 = vmatprep.subr.mxu0 0.0
        %1632 = vmatpush1.msra.mxu0 0.0
        %1633 = vmatprep.subr.mxu0 0.0
        %1634 = vmatpush1.msra.mxu0 0.0
        %1635 = vmatprep.subr.mxu0 0.0
        %1636 = vmatpush1.msra.mxu0 0.0
        %1637 = vmatprep.subr.mxu0 0.0
        %1638 = vmatpush1.msra.mxu0 0.0
        %1639 = vmatprep.subr.mxu0 0.0
        %1640 = vmatpush1.msra.mxu0 0.0
        %1641 = vmatprep.subr.mxu0 0.0
        %1642 = vmatpush1.msra.mxu0 0.0
        %1643 = vmatprep.subr.mxu0 0.0
        %1644 = vmatpush1.msra.mxu0 0.0
        %1645 = vmatprep.subr.mxu0 0.0
        %1646 = vmatpush1.msra.mxu0 0.0
        %1647 = vmatprep.subr.mxu0 0.0
        %1648 = vmatpush1.msra.mxu0 0.0
        %1649 = vmatprep.subr.mxu0 0.0
        %1650 = vmatpush1.msra.mxu0 0.0
        %1651 = vmatprep.subr.mxu0 0.0
        %1652 = vmatpush1.msra.mxu0 0.0
        %1653 = vmatprep.subr.mxu0 0.0
        %1654 = vmatpush1.msra.mxu0 0.0
        %1655 = vmatprep.subr.mxu0 0.0
        %1656 = vmatpush1.msra.mxu0 0.0
        %1657 = vmatprep.subr.mxu0 0.0
        %1658 = vmatpush1.msra.mxu0 0.0
        %1659 = vmatprep.subr.mxu0 0.0
        %1660 = vmatpush1.msra.mxu0 0.0
        %1661 = vmatprep.subr.mxu0 0.0
        %1662 = vmatpush1.msra.mxu0 0.0
        %1663 = vmatprep.subr.mxu0 0.0
        %1664 = vmatpush1.msra.mxu0 0.0
        %1665 = vmatprep.subr.mxu0 0.0
        %1666 = vmatpush1.msra.mxu0 0.0
        %1667 = vmatprep.subr.mxu0 0.0
        %1668 = vmatpush1.msra.mxu0 0.0
        %1669 = vmatprep.subr.mxu0 0.0
        %1670 = vmatpush1.msra.mxu0 0.0
        %1671 = vmatprep.subr.mxu0 0.0
        %1672 = vmatpush1.msra.mxu0 0.0
        %1673 = vmatprep.mubr.f32.mxu0 0.0
        %1674 = vmatmul.mubr.f32.gmra.mrb[0].mxu0 %v1607
        %v1675 = vpop.f32.mrb[0].mxu0
        %v1676 = vadd.f32 0.0, %v1675
        %v1677 = vpop.f32.mrb[0].mxu0
        %1678 = vdwg.mxu0
        %1679 = vxpose.xlu0.b32.start [1/16] %v1044, 128
        %1680 = vxpose.xlu0.b32.cont [2/16] %v1045, 128
        %1681 = vxpose.xlu0.b32.cont [3/16] 0.0, 128
        %1682 = vxpose.xlu0.b32.cont [4/16] 0.0, 128
        %1683 = vxpose.xlu0.b32.cont [5/16] 0.0, 128
        %1684 = vxpose.xlu0.b32.cont [6/16] 0.0, 128
        %1685 = vxpose.xlu0.b32.cont [7/16] 0.0, 128
        %1686 = vxpose.xlu0.b32.cont [8/16] 0.0, 128
        %1687 = vxpose.xlu0.b32.cont [9/16] 0.0, 128
        %1688 = vxpose.xlu0.b32.cont [10/16] 0.0, 128
        %1689 = vxpose.xlu0.b32.cont [11/16] 0.0, 128
        %1690 = vxpose.xlu0.b32.cont [12/16] 0.0, 128
        %1691 = vxpose.xlu0.b32.cont [13/16] 0.0, 128
        %1692 = vxpose.xlu0.b32.cont [14/16] 0.0, 128
        %1693 = vxpose.xlu0.b32.cont [15/16] 0.0, 128
        %1694 = vxpose.xlu0.b32.end [16/16] 0.0, 128
        %v1695 = vpop.trf.xlu0
        %v1696 = vpop.trf.xlu0
        %v1697 = vpop.trf.xlu0
        %v1698 = vpop.trf.xlu0
        %v1699 = vpop.trf.xlu0
        %v1700 = vpop.trf.xlu0
        %v1701 = vpop.trf.xlu0
        %v1702 = vpop.trf.xlu0
        %v1703 = vpop.trf.xlu0
        %v1704 = vpop.trf.xlu0
        %v1705 = vpop.trf.xlu0
        %v1706 = vpop.trf.xlu0
        %v1707 = vpop.trf.xlu0
        %v1708 = vpop.trf.xlu0
        %v1709 = vpop.trf.xlu0
        %v1710 = vpop.trf.xlu0
        %v1712 = vsel %vm1080, %v1695, 0
        %1714 = vmatprep.subr.mxu0 0.0
        %1715 = vmatpush1.msra.mxu0 %v813
        %1716 = vmatprep.subr.mxu0 0.0
        %1717 = vmatpush1.msra.mxu0 %v818
        %1718 = vmatprep.subr.mxu0 0.0
        %1719 = vmatpush1.msra.mxu0 0.0
        %1720 = vmatprep.subr.mxu0 0.0
        %1721 = vmatpush1.msra.mxu0 0.0
        %1722 = vmatprep.subr.mxu0 0.0
        %1723 = vmatpush1.msra.mxu0 0.0
        %1724 = vmatprep.subr.mxu0 0.0
        %1725 = vmatpush1.msra.mxu0 0.0
        %1726 = vmatprep.subr.mxu0 0.0
        %1727 = vmatpush1.msra.mxu0 0.0
        %1728 = vmatprep.subr.mxu0 0.0
        %1729 = vmatpush1.msra.mxu0 0.0
        %1730 = vmatprep.subr.mxu0 0.0
        %1731 = vmatpush1.msra.mxu0 0.0
        %1732 = vmatprep.subr.mxu0 0.0
        %1733 = vmatpush1.msra.mxu0 0.0
        %1734 = vmatprep.subr.mxu0 0.0
        %1735 = vmatpush1.msra.mxu0 0.0
        %1736 = vmatprep.subr.mxu0 0.0
        %1737 = vmatpush1.msra.mxu0 0.0
        %1738 = vmatprep.subr.mxu0 0.0
        %1739 = vmatpush1.msra.mxu0 0.0
        %1740 = vmatprep.subr.mxu0 0.0
        %1741 = vmatpush1.msra.mxu0 0.0
        %1742 = vmatprep.subr.mxu0 0.0
        %1743 = vmatpush1.msra.mxu0 0.0
        %1744 = vmatprep.subr.mxu0 0.0
        %1745 = vmatpush1.msra.mxu0 0.0
        %1746 = vmatprep.subr.mxu0 0.0
        %1747 = vmatpush1.msra.mxu0 0.0
        %1748 = vmatprep.subr.mxu0 0.0
        %1749 = vmatpush1.msra.mxu0 0.0
        %1750 = vmatprep.subr.mxu0 0.0
        %1751 = vmatpush1.msra.mxu0 0.0
        %1752 = vmatprep.subr.mxu0 0.0
        %1753 = vmatpush1.msra.mxu0 0.0
        %1754 = vmatprep.subr.mxu0 0.0
        %1755 = vmatpush1.msra.mxu0 0.0
        %1756 = vmatprep.subr.mxu0 0.0
        %1757 = vmatpush1.msra.mxu0 0.0
        %1758 = vmatprep.subr.mxu0 0.0
        %1759 = vmatpush1.msra.mxu0 0.0
        %1760 = vmatprep.subr.mxu0 0.0
        %1761 = vmatpush1.msra.mxu0 0.0
        %1762 = vmatprep.subr.mxu0 0.0
        %1763 = vmatpush1.msra.mxu0 0.0
        %1764 = vmatprep.subr.mxu0 0.0
        %1765 = vmatpush1.msra.mxu0 0.0
        %1766 = vmatprep.subr.mxu0 0.0
        %1767 = vmatpush1.msra.mxu0 0.0
        %1768 = vmatprep.subr.mxu0 0.0
        %1769 = vmatpush1.msra.mxu0 0.0
        %1770 = vmatprep.subr.mxu0 0.0
        %1771 = vmatpush1.msra.mxu0 0.0
        %1772 = vmatprep.subr.mxu0 0.0
        %1773 = vmatpush1.msra.mxu0 0.0
        %1774 = vmatprep.subr.mxu0 0.0
        %1775 = vmatpush1.msra.mxu0 0.0
        %1776 = vmatprep.subr.mxu0 0.0
        %1777 = vmatpush1.msra.mxu0 0.0
        %1778 = vmatprep.mubr.f32.mxu0 0.0
        %1779 = vmatmul.mubr.f32.gmra.mrb[0].mxu0 %v1712
        %v1780 = vpop.f32.mrb[0].mxu0
        %v1781 = vadd.f32 0.0, %v1780
        %v1782 = vpop.f32.mrb[0].mxu0
        %1783 = vdwg.mxu0
        %1784 = vxpose.xlu0.b32.start [1/16] %v1046, 128
        %1785 = vxpose.xlu0.b32.cont [2/16] %v1047, 128
        %1786 = vxpose.xlu0.b32.cont [3/16] 0.0, 128
        %1787 = vxpose.xlu0.b32.cont [4/16] 0.0, 128
        %1788 = vxpose.xlu0.b32.cont [5/16] 0.0, 128
        %1789 = vxpose.xlu0.b32.cont [6/16] 0.0, 128
        %1790 = vxpose.xlu0.b32.cont [7/16] 0.0, 128
        %1791 = vxpose.xlu0.b32.cont [8/16] 0.0, 128
        %1792 = vxpose.xlu0.b32.cont [9/16] 0.0, 128
        %1793 = vxpose.xlu0.b32.cont [10/16] 0.0, 128
        %1794 = vxpose.xlu0.b32.cont [11/16] 0.0, 128
        %1795 = vxpose.xlu0.b32.cont [12/16] 0.0, 128
        %1796 = vxpose.xlu0.b32.cont [13/16] 0.0, 128
        %1797 = vxpose.xlu0.b32.cont [14/16] 0.0, 128
        %1798 = vxpose.xlu0.b32.cont [15/16] 0.0, 128
        %1799 = vxpose.xlu0.b32.end [16/16] 0.0, 128
        %v1800 = vpop.trf.xlu0
        %v1801 = vpop.trf.xlu0
        %v1802 = vpop.trf.xlu0
        %v1803 = vpop.trf.xlu0
        %v1804 = vpop.trf.xlu0
        %v1805 = vpop.trf.xlu0
        %v1806 = vpop.trf.xlu0
        %v1807 = vpop.trf.xlu0
        %v1808 = vpop.trf.xlu0
        %v1809 = vpop.trf.xlu0
        %v1810 = vpop.trf.xlu0
        %v1811 = vpop.trf.xlu0
        %v1812 = vpop.trf.xlu0
        %v1813 = vpop.trf.xlu0
        %v1814 = vpop.trf.xlu0
        %v1815 = vpop.trf.xlu0
        %v1817 = vsel %vm1080, %v1800, 0
        %1819 = vmatprep.subr.mxu0 0.0
        %1820 = vmatpush1.msra.mxu0 %v823
        %1821 = vmatprep.subr.mxu0 0.0
        %1822 = vmatpush1.msra.mxu0 %v828
        %1823 = vmatprep.subr.mxu0 0.0
        %1824 = vmatpush1.msra.mxu0 0.0
        %1825 = vmatprep.subr.mxu0 0.0
        %1826 = vmatpush1.msra.mxu0 0.0
        %1827 = vmatprep.subr.mxu0 0.0
        %1828 = vmatpush1.msra.mxu0 0.0
        %1829 = vmatprep.subr.mxu0 0.0
        %1830 = vmatpush1.msra.mxu0 0.0
        %1831 = vmatprep.subr.mxu0 0.0
        %1832 = vmatpush1.msra.mxu0 0.0
        %1833 = vmatprep.subr.mxu0 0.0
        %1834 = vmatpush1.msra.mxu0 0.0
        %1835 = vmatprep.subr.mxu0 0.0
        %1836 = vmatpush1.msra.mxu0 0.0
        %1837 = vmatprep.subr.mxu0 0.0
        %1838 = vmatpush1.msra.mxu0 0.0
        %1839 = vmatprep.subr.mxu0 0.0
        %1840 = vmatpush1.msra.mxu0 0.0
        %1841 = vmatprep.subr.mxu0 0.0
        %1842 = vmatpush1.msra.mxu0 0.0
        %1843 = vmatprep.subr.mxu0 0.0
        %1844 = vmatpush1.msra.mxu0 0.0
        %1845 = vmatprep.subr.mxu0 0.0
        %1846 = vmatpush1.msra.mxu0 0.0
        %1847 = vmatprep.subr.mxu0 0.0
        %1848 = vmatpush1.msra.mxu0 0.0
        %1849 = vmatprep.subr.mxu0 0.0
        %1850 = vmatpush1.msra.mxu0 0.0
        %1851 = vmatprep.subr.mxu0 0.0
        %1852 = vmatpush1.msra.mxu0 0.0
        %1853 = vmatprep.subr.mxu0 0.0
        %1854 = vmatpush1.msra.mxu0 0.0
        %1855 = vmatprep.subr.mxu0 0.0
        %1856 = vmatpush1.msra.mxu0 0.0
        %1857 = vmatprep.subr.mxu0 0.0
        %1858 = vmatpush1.msra.mxu0 0.0
        %1859 = vmatprep.subr.mxu0 0.0
        %1860 = vmatpush1.msra.mxu0 0.0
        %1861 = vmatprep.subr.mxu0 0.0
        %1862 = vmatpush1.msra.mxu0 0.0
        %1863 = vmatprep.subr.mxu0 0.0
        %1864 = vmatpush1.msra.mxu0 0.0
        %1865 = vmatprep.subr.mxu0 0.0
        %1866 = vmatpush1.msra.mxu0 0.0
        %1867 = vmatprep.subr.mxu0 0.0
        %1868 = vmatpush1.msra.mxu0 0.0
        %1869 = vmatprep.subr.mxu0 0.0
        %1870 = vmatpush1.msra.mxu0 0.0
        %1871 = vmatprep.subr.mxu0 0.0
        %1872 = vmatpush1.msra.mxu0 0.0
        %1873 = vmatprep.subr.mxu0 0.0
        %1874 = vmatpush1.msra.mxu0 0.0
        %1875 = vmatprep.subr.mxu0 0.0
        %1876 = vmatpush1.msra.mxu0 0.0
        %1877 = vmatprep.subr.mxu0 0.0
        %1878 = vmatpush1.msra.mxu0 0.0
        %1879 = vmatprep.subr.mxu0 0.0
        %1880 = vmatpush1.msra.mxu0 0.0
        %1881 = vmatprep.subr.mxu0 0.0
        %1882 = vmatpush1.msra.mxu0 0.0
        %1883 = vmatprep.mubr.f32.mxu0 0.0
        %1884 = vmatmul.mubr.f32.gmra.mrb[0].mxu0 %v1817
        %v1885 = vpop.f32.mrb[0].mxu0
        %v1886 = vadd.f32 0.0, %v1885
        %v1887 = vpop.f32.mrb[0].mxu0
        %1888 = vdwg.mxu0
        %v1889 = vcombine.low %v1151, %v1361
        %v1890 = vcombine.high %v1151, %v1361
        %v1892 = vunpack.c.l.s4 1983009808
        %v1893 = vunpack.c.0.s8 %v1892
        %v1894 = vlaneseq
        %v1895 = vshrl.u32 %v1894, 7
        %v1896 = vsub.s32 %v1893, %v1895
        %v1897 = vrot.slane %v1889, %v1896
        %v1899 = vunpack.c.l.s4 1983009808
        %v1900 = vunpack.c.0.s8 %v1899
        %v1901 = vlaneseq
        %v1902 = vshrl.u32 %v1901, 7
        %v1903 = vsub.s32 %v1900, %v1902
        %v1904 = vrot.slane %v1890, %v1903
        %v1905 = vcombine.low %v1256, %v1466
        %v1906 = vcombine.high %v1256, %v1466
        %v1908 = vunpack.c.l.s4 1983009808
        %v1909 = vunpack.c.0.s8 %v1908
        %v1910 = vlaneseq
        %v1911 = vshrl.u32 %v1910, 7
        %v1912 = vsub.s32 %v1909, %v1911
        %v1913 = vrot.slane %v1905, %v1912
        %v1915 = vunpack.c.l.s4 1983009808
        %v1916 = vunpack.c.0.s8 %v1915
        %v1917 = vlaneseq
        %v1918 = vshrl.u32 %v1917, 7
        %v1919 = vsub.s32 %v1916, %v1918
        %v1920 = vrot.slane %v1906, %v1919
        %v1921 = vcombine.low %v1571, %v1781
        %v1922 = vcombine.high %v1571, %v1781
        %v1924 = vunpack.c.l.s4 1983009808
        %v1925 = vunpack.c.0.s8 %v1924
        %v1926 = vlaneseq
        %v1927 = vshrl.u32 %v1926, 7
        %v1928 = vsub.s32 %v1925, %v1927
        %v1929 = vrot.slane %v1921, %v1928
        %v1931 = vunpack.c.l.s4 1983009808
        %v1932 = vunpack.c.0.s8 %v1931
        %v1933 = vlaneseq
        %v1934 = vshrl.u32 %v1933, 7
        %v1935 = vsub.s32 %v1932, %v1934
        %v1936 = vrot.slane %v1922, %v1935
        %v1937 = vcombine.low %v1676, %v1886
        %v1938 = vcombine.high %v1676, %v1886
        %v1940 = vunpack.c.l.s4 1983009808
        %v1941 = vunpack.c.0.s8 %v1940
        %v1942 = vlaneseq
        %v1943 = vshrl.u32 %v1942, 7
        %v1944 = vsub.s32 %v1941, %v1943
        %v1945 = vrot.slane %v1937, %v1944
        %v1947 = vunpack.c.l.s4 1983009808
        %v1948 = vunpack.c.0.s8 %v1947
        %v1949 = vlaneseq
        %v1950 = vshrl.u32 %v1949, 7
        %v1951 = vsub.s32 %v1948, %v1950
        %v1952 = vrot.slane %v1938, %v1951
        %v1953 = vcombine.low %v1897, %v1913
        %v1954 = vcombine.high %v1897, %v1913
        %v1956 = vunpack.c.l.s4 1934713408
        %v1957 = vunpack.c.0.s8 %v1956
        %v1958 = vlaneseq
        %v1959 = vshrl.u32 %v1958, 7
        %v1960 = vsub.s32 %v1957, %v1959
        %v1961 = vrot.slane %v1953, %v1960
        %v1963 = vunpack.c.l.s4 1934713408
        %v1964 = vunpack.c.0.s8 %v1963
        %v1965 = vlaneseq
        %v1966 = vshrl.u32 %v1965, 7
        %v1967 = vsub.s32 %v1964, %v1966
        %v1968 = vrot.slane %v1954, %v1967
        %v1969 = vcombine.low %v1904, %v1920
        %v1970 = vcombine.high %v1904, %v1920
        %v1972 = vunpack.c.l.s4 1934713408
        %v1973 = vunpack.c.0.s8 %v1972
        %v1974 = vlaneseq
        %v1975 = vshrl.u32 %v1974, 7
        %v1976 = vsub.s32 %v1973, %v1975
        %v1977 = vrot.slane %v1969, %v1976
        %v1979 = vunpack.c.l.s4 1934713408
        %v1980 = vunpack.c.0.s8 %v1979
        %v1981 = vlaneseq
        %v1982 = vshrl.u32 %v1981, 7
        %v1983 = vsub.s32 %v1980, %v1982
        %v1984 = vrot.slane %v1970, %v1983
        %v1985 = vcombine.low %v1929, %v1945
        %v1986 = vcombine.high %v1929, %v1945
        %v1988 = vunpack.c.l.s4 1934713408
        %v1989 = vunpack.c.0.s8 %v1988
        %v1990 = vlaneseq
        %v1991 = vshrl.u32 %v1990, 7
        %v1992 = vsub.s32 %v1989, %v1991
        %v1993 = vrot.slane %v1985, %v1992
        %v1995 = vunpack.c.l.s4 1934713408
        %v1996 = vunpack.c.0.s8 %v1995
        %v1997 = vlaneseq
        %v1998 = vshrl.u32 %v1997, 7
        %v1999 = vsub.s32 %v1996, %v1998
        %v2000 = vrot.slane %v1986, %v1999
        %v2001 = vcombine.low %v1936, %v1952
        %v2002 = vcombine.high %v1936, %v1952
        %v2004 = vunpack.c.l.s4 1934713408
        %v2005 = vunpack.c.0.s8 %v2004
        %v2006 = vlaneseq
        %v2007 = vshrl.u32 %v2006, 7
        %v2008 = vsub.s32 %v2005, %v2007
        %v2009 = vrot.slane %v2001, %v2008
        %v2011 = vunpack.c.l.s4 1934713408
        %v2012 = vunpack.c.0.s8 %v2011
        %v2013 = vlaneseq
        %v2014 = vshrl.u32 %v2013, 7
        %v2015 = vsub.s32 %v2012, %v2014
        %v2016 = vrot.slane %v2002, %v2015
        %v2017 = vcombine.low %v1961, %v1993
        %v2018 = vcombine.high %v1961, %v1993
        %v2019 = vcombine.low %v1968, %v2000
        %v2020 = vcombine.high %v1968, %v2000
        %v2021 = vcombine.low %v1977, %v2009
        %v2022 = vcombine.high %v1977, %v2009
        %v2023 = vcombine.low %v1984, %v2016
        %v2024 = vcombine.high %v1984, %v2016
        %2026 = vrot.lane.b32.xlu0 %v2018, 32
        %v2027 = vpop.permute.xlu0 %2026
        %2030 = vrot.lane.b32.xlu0 %v2019, 64
        %v2031 = vpop.permute.xlu0 %2030
        %2034 = vrot.lane.b32.xlu0 %v2020, 96
        %v2035 = vpop.permute.xlu0 %2034
        %2038 = vrot.lane.b32.xlu0 %v2022, 32
        %v2039 = vpop.permute.xlu0 %2038
        %2042 = vrot.lane.b32.xlu0 %v2023, 64
        %v2043 = vpop.permute.xlu0 %2042
        %2046 = vrot.lane.b32.xlu0 %v2024, 96
        %v2047 = vpop.permute.xlu0 %2046
        %vm2049 = vcmask 261120
        %v2050 = vsel %vm2049, %v2017, %v2027
        %v2051 = vsel %vm429, %v2050, %v2031
        %vm2052 = vcmask 785408
        %v2053 = vsel %vm2052, %v2051, %v2035
        %v2054 = vsel %vm2049, %v2021, %v2039
        %v2055 = vsel %vm429, %v2054, %v2043
        %v2056 = vsel %vm2052, %v2055, %v2047
        %v2057 = vld [vmem:[#allocation7] sm:$0xff]
        %v2058 = vld [vmem:[#allocation7 + $0x8] sm:$0xff]
        %v2059 = vld [vmem:[#allocation7 + $0x10] sm:$0xff]
        %v2060 = vld [vmem:[#allocation7 + $0x18] sm:$0xff]
        %v2061 = vld [vmem:[#allocation7 + $0x20] sm:$0xff]
        %v2062 = vld [vmem:[#allocation7 + $0x28] sm:$0xff]
        %v2063 = vld [vmem:[#allocation7 + $0x30] sm:$0xff]
        %v2064 = vld [vmem:[#allocation7 + $0x38] sm:$0xff]
        %v2065 = vld [vmem:[#allocation7 + $0x40] sm:$0xff]
        %v2066 = vld [vmem:[#allocation7 + $0x48] sm:$0xff]
        %v2067 = vld [vmem:[#allocation7 + $0x50] sm:$0xff]
        %v2068 = vld [vmem:[#allocation7 + $0x58] sm:$0xff]
        %v2069 = vld [vmem:[#allocation7 + $0x60] sm:$0xff]
        %v2070 = vld [vmem:[#allocation7 + $0x68] sm:$0xff]
        %v2071 = vld [vmem:[#allocation7 + $0x70] sm:$0xff]
        %v2072 = vld [vmem:[#allocation7 + $0x78] sm:$0xff]
        %v2073 = vld [vmem:[#allocation7 + $0x80] sm:$0xff]
        %v2074 = vld [vmem:[#allocation7 + $0x88] sm:$0xff]
        %v2075 = vld [vmem:[#allocation7 + $0x90] sm:$0xff]
        %v2076 = vld [vmem:[#allocation7 + $0x98] sm:$0xff]
        %v2077 = vld [vmem:[#allocation7 + $0xa0] sm:$0xff]
        %v2078 = vld [vmem:[#allocation7 + $0xa8] sm:$0xff]
        %v2079 = vld [vmem:[#allocation7 + $0xb0] sm:$0xff]
        %v2080 = vld [vmem:[#allocation7 + $0xb8] sm:$0xff]
        %v2081 = vld [vmem:[#allocation7 + $0xc0] sm:$0xff]
        %v2082 = vld [vmem:[#allocation7 + $0xc8] sm:$0xff]
        %v2083 = vld [vmem:[#allocation7 + $0xd0] sm:$0xff]
        %v2084 = vld [vmem:[#allocation7 + $0xd8] sm:$0xff]
        %v2085 = vld [vmem:[#allocation7 + $0xe0] sm:$0xff]
        %v2086 = vld [vmem:[#allocation7 + $0xe8] sm:$0xff]
        %v2087 = vld [vmem:[#allocation7 + $0xf0] sm:$0xff]
        %v2088 = vld [vmem:[#allocation7 + $0xf8] sm:$0xff]
        %v2089 = vld [vmem:[%s7] sm:$0x1]
        %v2091 = vlaneseq
        %v2092 = vshrl.u32 %v2091, 7
        %v2093 = vsub.s32 0, %v2092
        %v2094 = vrot.slane %v2089, %v2093
        %2096 = vmatprep.subr.mxu0 0.0
        %2097 = vmatpush1.msra.mxu0 %v2057
        %2098 = vmatprep.subr.mxu0 0.0
        %2099 = vmatpush1.msra.mxu0 %v2058
        %2100 = vmatprep.subr.mxu0 0.0
        %2101 = vmatpush1.msra.mxu0 %v2059
        %2102 = vmatprep.subr.mxu0 0.0
        %2103 = vmatpush1.msra.mxu0 %v2060
        %2104 = vmatprep.subr.mxu0 0.0
        %2105 = vmatpush1.msra.mxu0 %v2061
        %2106 = vmatprep.subr.mxu0 0.0
        %2107 = vmatpush1.msra.mxu0 %v2062
        %2108 = vmatprep.subr.mxu0 0.0
        %2109 = vmatpush1.msra.mxu0 %v2063
        %2110 = vmatprep.subr.mxu0 0.0
        %2111 = vmatpush1.msra.mxu0 %v2064
        %2112 = vmatprep.subr.mxu0 0.0
        %2113 = vmatpush1.msra.mxu0 %v2065
        %2114 = vmatprep.subr.mxu0 0.0
        %2115 = vmatpush1.msra.mxu0 %v2066
        %2116 = vmatprep.subr.mxu0 0.0
        %2117 = vmatpush1.msra.mxu0 %v2067
        %2118 = vmatprep.subr.mxu0 0.0
        %2119 = vmatpush1.msra.mxu0 %v2068
        %2120 = vmatprep.subr.mxu0 0.0
        %2121 = vmatpush1.msra.mxu0 %v2069
        %2122 = vmatprep.subr.mxu0 0.0
        %2123 = vmatpush1.msra.mxu0 %v2070
        %2124 = vmatprep.subr.mxu0 0.0
        %2125 = vmatpush1.msra.mxu0 %v2071
        %2126 = vmatprep.subr.mxu0 0.0
        %2127 = vmatpush1.msra.mxu0 %v2072
        %2128 = vmatprep.subr.mxu0 0.0
        %2129 = vmatpush1.msra.mxu0 %v2073
        %2130 = vmatprep.subr.mxu0 0.0
        %2131 = vmatpush1.msra.mxu0 %v2074
        %2132 = vmatprep.subr.mxu0 0.0
        %2133 = vmatpush1.msra.mxu0 %v2075
        %2134 = vmatprep.subr.mxu0 0.0
        %2135 = vmatpush1.msra.mxu0 %v2076
        %2136 = vmatprep.subr.mxu0 0.0
        %2137 = vmatpush1.msra.mxu0 %v2077
        %2138 = vmatprep.subr.mxu0 0.0
        %2139 = vmatpush1.msra.mxu0 %v2078
        %2140 = vmatprep.subr.mxu0 0.0
        %2141 = vmatpush1.msra.mxu0 %v2079
        %2142 = vmatprep.subr.mxu0 0.0
        %2143 = vmatpush1.msra.mxu0 %v2080
        %2144 = vmatprep.subr.mxu0 0.0
        %2145 = vmatpush1.msra.mxu0 %v2081
        %2146 = vmatprep.subr.mxu0 0.0
        %2147 = vmatpush1.msra.mxu0 %v2082
        %2148 = vmatprep.subr.mxu0 0.0
        %2149 = vmatpush1.msra.mxu0 %v2083
        %2150 = vmatprep.subr.mxu0 0.0
        %2151 = vmatpush1.msra.mxu0 %v2084
        %2152 = vmatprep.subr.mxu0 0.0
        %2153 = vmatpush1.msra.mxu0 %v2085
        %2154 = vmatprep.subr.mxu0 0.0
        %2155 = vmatpush1.msra.mxu0 %v2086
        %2156 = vmatprep.subr.mxu0 0.0
        %2157 = vmatpush1.msra.mxu0 %v2087
        %2158 = vmatprep.subr.mxu0 0.0
        %2159 = vmatpush1.msra.mxu0 %v2088
        %2160 = vmatprep.mubr.f32.mxu0 %v2056
        %2161 = vmatmul.mubr.f32.gmra.mrb[0].mxu0 %v2053
        %v2162 = vpop.f32.mrb[0].mxu0
        %v2163 = vadd.f32 %v2094, %v2162
        %v2164 = vpop.f32.mrb[0].mxu0
        %2165 = vdwg.mxu0
        %2166 = vst [vmem:[%s379] sm:$0xff] %v2163
        %s2167 = sand.u32 %s214, 1
        %s2168 = scalar_lea.sflag [#allocation4], %s2167
        %s2169 = sand.u32 %s214, 1
        %s2170 = smul.addr %s2169, 8
        %s2171 = scalar_lea.vmem [#allocation8], %s2170
        // Predicated region
        $region65: #{tpu_custom_call.1} parent=51 // pred_check
          %p2172 = pneg %p224
        $region66: #{tpu_custom_call.1} parent=51 // pred_check_branch
          %2174 = sbr.rel (%p2172) target = $region68
        $region67: #{tpu_custom_call.1} parent=51 // pred_region
          %s2176 = ssub.s32 128, 128
          %2177 = vsyncadd %s2168, %s2176
          %s2178 = smul.addr %s28, 128
          %s2179 = scalar_lea.hbm %s8, %s2178
          %s2181 = sshll.u32 %s2171, 4
          %s2182 = int_to_ptr.vmem [resolvable:$true] %s2181
          %2184 = dma.vmem_to_hbm [thread:$0]  %s2182, 128, %s2179, %s2168
        $region68: #{tpu_custom_call.1} parent=51 // pred_fallthru
          _
      $region52: #{tpu_custom_call.1} parent=5 // pred_fallthru
        _
      %p2185 = scmp.le.s32.totalorder 2, %s23
      // Predicated region
      $region69: #{tpu_custom_call.1} parent=5 // pred_check
        %p2186 = pneg %p2185
      $region70: #{tpu_custom_call.1} parent=5 // pred_check_branch
        %2188 = sbr.rel (%p2186) target = $region72
      $region71: #{tpu_custom_call.1} parent=5 // pred_region
        %s2189 = ssub.s32 %s23, 2
        // Predicated region
        $region73: #{tpu_custom_call.1} parent=71 // pred_check
          %p2190 = pneg %p230
        $region74: #{tpu_custom_call.1} parent=71 // pred_check_branch
          %2192 = sbr.rel (%p2190) target = $region76
        $region75: #{tpu_custom_call.1} parent=71 // pred_region
          %s2193 = sand.u32 %s215, 1
          %s2194 = scalar_lea.sflag [#allocation4], %s2193
          %s2195 = sand.u32 %s215, 1
          %s2196 = smul.addr %s2195, 8
          %s2197 = scalar_lea.vmem [#allocation8], %s2196
          %2198 = dma.done %s2194, 128
        $region76: #{tpu_custom_call.1} parent=71 // pred_fallthru
          _
      $region72: #{tpu_custom_call.1} parent=5 // pred_fallthru
        _
    $region6: #{tpu_custom_call.1} parent=1 // loop_footer
      %s27 = sadd.s32 1, %s23
    $region7: #{tpu_custom_call.1} parent=1 // loop_footer_branch
      %22 = sbr.rel target = $region3
    $region8: #{tpu_custom_call.1} parent=1 // loop_exit
      _
    %2199 = vsyncpa [#allocation3], 1
    %s2200 = scalar_lea.sflag [#allocation3], 1
    %2201 = vsyncpa %s2200, 1
    %2202 = vsyncpa [#allocation6], 1
    %s2203 = scalar_lea.sflag [#allocation6], 1
    %2204 = vsyncpa %s2203, 1
    %2205 = vsyncpa [#allocation4], 1
    %s2206 = scalar_lea.sflag [#allocation4], 1
    %2207 = vsyncpa %s2206, 1

</llo_original>
